<compile_context>
chip_gen: v5e
topology: v5e:2x2
jax: 0.10.0
libtpu: 0.0.40
codegen_flags: <defaults>
</compile_context>

<pallas_src>
import jax
import jax.numpy as jnp
from jax.experimental import pallas as pl
from jax.experimental.pallas import tpu as pltpu

# ----------------------------- problem sizes -------------------------------
N_STATE = 16   # n
N_OBS = 8      # m
N_IN = 8       # p
BATCH = 4
DT = 0.05
LANES = 128

NS_BF16_ITERS = 8   # bulk Newton-Schulz iterations, bf16 MXU operands
NS_F32_ITERS = 2    # f32 polishing iterations (square away the bf16 residual)


def _eye(k, dtype=jnp.float32):
    r = jax.lax.broadcasted_iota(jnp.int32, (k, k), 0)
    c = jax.lax.broadcasted_iota(jnp.int32, (k, k), 1)
    return (r == c).astype(dtype)


def _block_diag(x):
    """(B, r, c) -> (B*r, B*c) block-diagonal."""
    b, r, c = x.shape
    eye_b = jnp.eye(b, dtype=x.dtype)
    return jnp.einsum("ab,aij->aibj", eye_b, x).reshape(b * r, b * c)


def _round_up(v, k):
    return ((v + k - 1) // k) * k


# ------------------------------ Pallas kernel ------------------------------
@jax.jit
def ekf_update_pallas(A, Bm, C, Q, R, P, xp_pred, e):
    Bsz, n, _ = A.shape
    m = C.shape[1]
    p = Bm.shape[2]
    N, M, Pd = Bsz * n, Bsz * m, Bsz * p
    assert N + 1 <= LANES and M <= LANES and Pd <= LANES

    # ---- lane-dense input slab layout (rows x 128), one DMA in -------------
    row_a, row_p, row_b = 0, N, 2 * N
    row_c = 3 * N
    row_q = row_c + M
    row_r = row_q + Pd
    row_e = row_r + M
    rows = _round_up(row_e + 1, 8)

    A_bd = _block_diag(A)                                  # (N, N)
    P_bd = _block_diag(P)                                  # (N, N)
    Bm_bd = _block_diag(Bm)                                # (N, Pd)
    C_bd = _block_diag(C)                                  # (M, N)
    Q_bd = jnp.kron(jnp.eye(Bsz, dtype=Q.dtype), Q)        # (Pd, Pd)
    R_bd = jnp.kron(jnp.eye(Bsz, dtype=R.dtype), R)        # (M, M)

    slab = jnp.zeros((rows, LANES), jnp.float32)
    slab = slab.at[row_a:row_a + N, 0:N].set(A_bd)
    slab = slab.at[row_p:row_p + N, 0:N].set(P_bd)
    slab = slab.at[row_b:row_b + N, 0:Pd].set(Bm_bd)
    slab = slab.at[row_c:row_c + M, 0:N].set(C_bd)
    slab = slab.at[row_q:row_q + Pd, 0:Pd].set(Q_bd)
    slab = slab.at[row_r:row_r + M, 0:M].set(R_bd)
    slab = slab.at[row_a:row_a + N, N].set(xp_pred.reshape(-1))   # xp column
    slab = slab.at[row_e, 0:M].set(e.reshape(-1))                 # e row

    def kernel(slab_ref, out_ref):
        f32 = jnp.float32

        def mm(a, b):        # a @ b
            return jax.lax.dot_general(a, b, (((1,), (0,)), ((), ())),
                                       preferred_element_type=f32)

        def mm_nt(a, b):     # a @ b.T  (no explicit transpose materialized)
            return jax.lax.dot_general(a, b, (((1,), (1,)), ((), ())),
                                       preferred_element_type=f32)

        Ak = slab_ref[row_a:row_a + N, 0:N]
        Pk = slab_ref[row_p:row_p + N, 0:N]
        Bk = slab_ref[row_b:row_b + N, 0:Pd]
        Ck = slab_ref[row_c:row_c + M, 0:N]
        Qk = slab_ref[row_q:row_q + Pd, 0:Pd]
        Rk = slab_ref[row_r:row_r + M, 0:M]
        xp_col = slab_ref[row_a:row_a + N, N:N + 1]        # (N, 1)
        e_row = slab_ref[row_e:row_e + 1, 0:M]             # (1, M)

        # Priori covariance:  P- = A P A^T + B Q B^T   (block-diag preserved)
        Pp = mm_nt(mm(Ak, Pk), Ak) + mm_nt(mm(Bk, Qk), Bk)

        # Innovation covariance:  S = C P- C^T + R
        S = mm_nt(mm(Ck, Pp), Ck) + Rk

        # inv(S) by Newton-Schulz; S is SPD in the EKF, so pinv == inv.
        # TODO(synk): torch.linalg.pinv handles rank-deficient S via SVD; no
        # clean Pallas equivalent, so we assume S nonsingular (standard EKF).
        # SPD seed X0 = I / ||S||_inf  ->  eig(I - X0 S) in [~0, 1).
        norm_inf = jnp.max(jnp.sum(jnp.abs(S), axis=1, keepdims=True),
                           axis=0, keepdims=True)          # (1, 1)
        X = pl.reciprocal(norm_inf, approx=True) * _eye(M)

        S_bf = S.astype(jnp.bfloat16)

        def ns_bf16(_, Xc):  # bulk of the dependent chain on bf16 operands
            Xb = Xc.astype(jnp.bfloat16)
            SX = jax.lax.dot_general(S_bf, Xb, (((1,), (0,)), ((), ())),
                                     preferred_element_type=f32)
            XSX = jax.lax.dot_general(Xb, SX.astype(jnp.bfloat16),
                                      (((1,), (0,)), ((), ())),
                                      preferred_element_type=f32)
            return 2.0 * Xc - XSX

        def ns_f32(_, Xc):   # f32 polish: squares away the bf16 residual
            return 2.0 * Xc - mm(Xc, mm(S, Xc))

        X = jax.lax.fori_loop(0, NS_BF16_ITERS, ns_bf16, X, unroll=True)
        Sinv = jax.lax.fori_loop(0, NS_F32_ITERS, ns_f32, X, unroll=True)

        # Kalman gain:  K = P- C^T Sinv                    (N, M)
        K = mm(mm_nt(Pp, Ck), Sinv)

        # Posteriori state:  x+ = xp + K e   (VPU multiply + lane reduce)
        x_col = xp_col + jnp.sum(K * e_row, axis=1, keepdims=True)

        # Posteriori covariance (Joseph form):
        #   P+ = (I - K C) P- (I - K C)^T + K R K^T
        IKC = _eye(N) - mm(K, Ck)
        P_new = mm_nt(mm(IKC, Pp), IKC) + mm_nt(mm(K, Rk), K)

        # One lane-dense (N, 2N) unmasked store: [ P+ | x+ broadcast ].
        out_ref[...] = jnp.concatenate(
            [P_new, jnp.broadcast_to(x_col, (N, N))], axis=1)

    out = pl.pallas_call(
        kernel,
        out_shape=jax.ShapeDtypeStruct((N, 2 * N), jnp.float32),
        grid=(1,),
        in_specs=[pl.BlockSpec((rows, LANES), lambda i: (0, 0))],
        out_specs=pl.BlockSpec((N, 2 * N), lambda i: (0, 0)),
        compiler_params=pltpu.CompilerParams(
            dimension_semantics=("arbitrary",)),
    )(slab)

    # Unpack the lane-dense output slab (plain XLA, outside the kernel).
    x_new = out[:, N].reshape(Bsz, n)
    P_bd_new = out[:, :N]
    P_new = jnp.stack([P_bd_new[b * n:(b + 1) * n, b * n:(b + 1) * n]
                       for b in range(Bsz)])
    return x_new, P_new


# --------------------- synthetic nonlinear IMU-like system -----------------
def make_system(key):
    k1, k2, k3, k4 = jax.random.split(key, 4)
    Wf = 0.10 * jax.random.normal(k1, (N_STATE, N_STATE), jnp.float32)
    Vf = 0.10 * jax.random.normal(k2, (N_STATE, N_IN), jnp.float32)
    Wg = 0.10 * jax.random.normal(k3, (N_OBS, N_STATE), jnp.float32)
    Vg = 0.05 * jax.random.normal(k4, (N_OBS, N_IN), jnp.float32)

    def f(x, u):  # state_transition
        return x + DT * jnp.tanh(Wf @ x + Vf @ u)

    def g(x, u):  # observation
        return jnp.tanh(Wg @ x + Vg @ u)

    return f, g


def linearize(f, g, state, inp):
    """pypose set_refpoint equivalent: Jacobians at the reference point."""
    A = jax.vmap(jax.jacfwd(f, argnums=0))(state, inp)      # (B, n, n)
    Bm = jax.vmap(jax.jacfwd(f, argnums=1))(state, inp)     # (B, n, p)
    C = jax.vmap(jax.jacfwd(g, argnums=0))(state, inp)      # (B, m, n)
    xp_pred = jax.vmap(f)(state, inp)                       # (B, n)
    y_pred = jax.vmap(g)(state, inp)                        # (B, m)
    return A, Bm, C, xp_pred, y_pred


# ------------------------------ pure-JAX reference -------------------------
def ekf_ref(A, Bm, C, Q, R, P, xp_pred, e):
    def one(Ab, Bb, Cb, Pb, xpb, eb):
        Pp = Ab @ Pb @ Ab.T + Bb @ Q @ Bb.T
        S = Cb @ Pp @ Cb.T + R
        K = Pp @ Cb.T @ jnp.linalg.pinv(S)
        x = xpb + K @ eb
        IKC = jnp.eye(Ab.shape[-1], dtype=jnp.float32) - K @ Cb
        Pn = IKC @ Pp @ IKC.T + K @ R @ K.T
        return x, Pn
    return jax.vmap(one)(A, Bm, C, P, xp_pred, e)


# ----------------------------------- main -----------------------------------
if __name__ == "__main__":
    key = jax.random.PRNGKey(0)
    k_sys, k_x, k_u, k_obs, k_P, k_Q, k_R = jax.random.split(key, 7)

    f, g = make_system(k_sys)

    state = 0.5 * jax.random.normal(k_x, (BATCH, N_STATE), jnp.float32)
    inp = 0.5 * jax.random.normal(k_u, (BATCH, N_IN), jnp.float32)
    obs = 0.5 * jax.random.normal(k_obs, (BATCH, N_OBS), jnp.float32)

    Lp = jax.random.normal(k_P, (BATCH, N_STATE, N_STATE), jnp.float32)
    P0 = 0.1 * jnp.eye(N_STATE, dtype=jnp.float32)[None] \
        + 0.02 * jnp.einsum("bij,bkj->bik", Lp, Lp) / N_STATE

    # Q is the input/transition-noise covariance used as B Q B^T -> (p, p).
    Lq = jax.random.normal(k_Q, (N_IN, N_IN), jnp.float32)
    Q = 0.01 * jnp.eye(N_IN, dtype=jnp.float32) + 0.002 * (Lq @ Lq.T) / N_IN
    Lr = jax.random.normal(k_R, (N_OBS, N_OBS), jnp.float32)
    R = 0.25 * jnp.eye(N_OBS, dtype=jnp.float32) + 0.01 * (Lr @ Lr.T) / N_OBS

    # "set_refpoint" + state_transition/observation (plain-JAX glue).
    A, Bm, C, xp_pred, y_pred = linearize(f, g, state, inp)
    e = obs - y_pred

    # EKF update in the Pallas kernel.
    x_out, P_out = jax.block_until_ready(
        ekf_update_pallas(A, Bm, C, Q, R, P0, xp_pred, e))

    # Reference check (full-precision matmuls for the reference path only).
    with jax.default_matmul_precision("highest"):
        x_ref, P_ref = ekf_ref(A, Bm, C, Q, R, P0, xp_pred, e)
    assert jnp.allclose(x_out, x_ref, atol=2e-3, rtol=2e-3), \
        float(jnp.max(jnp.abs(x_out - x_ref)))
    assert jnp.allclose(P_out, P_ref, atol=2e-3, rtol=2e-3), \
        float(jnp.max(jnp.abs(P_out - P_ref)))

    print("KERNEL_OK")
</pallas_src>

<mosaic_0001>
module attributes {stable_mosaic.version = 11 : i64} {
  func.func @kernel(%arg0: i32, %arg1: memref<296x128xf32, #tpu.memory_space<vmem>>, %arg2: memref<64x128xf32, #tpu.memory_space<vmem>>) attributes {dimension_semantics = [#tpu.dimension_semantics<arbitrary>], iteration_bounds = array<i64: 1>, scalar_prefetch = 0 : i64, scratch_operands = 0 : i64, tpu.core_type = #tpu.core_type<tc>, window_params = [{pipeline_mode = #tpu.pipeline_mode<synchronous>, transform_indices = @transform_0, window_bounds = array<i64: 296, 128>}, {pipeline_mode = #tpu.pipeline_mode<synchronous>, transform_indices = @transform_1, window_bounds = array<i64: 64, 128>}]} {
    %c0 = arith.constant 0 : index
    %c0_0 = arith.constant 0 : index
    %0 = vector.load %arg1[%c0, %c0_0] : memref<296x128xf32, #tpu.memory_space<vmem>>, vector<64x64xf32>
    %c64 = arith.constant 64 : index
    %c0_1 = arith.constant 0 : index
    %1 = vector.load %arg1[%c64, %c0_1] : memref<296x128xf32, #tpu.memory_space<vmem>>, vector<64x64xf32>
    %c128 = arith.constant 128 : index
    %c0_2 = arith.constant 0 : index
    %2 = vector.load %arg1[%c128, %c0_2] : memref<296x128xf32, #tpu.memory_space<vmem>>, vector<64x32xf32>
    %c192 = arith.constant 192 : index
    %c0_3 = arith.constant 0 : index
    %3 = vector.load %arg1[%c192, %c0_3] : memref<296x128xf32, #tpu.memory_space<vmem>>, vector<32x64xf32>
    %c224 = arith.constant 224 : index
    %c0_4 = arith.constant 0 : index
    %4 = vector.load %arg1[%c224, %c0_4] : memref<296x128xf32, #tpu.memory_space<vmem>>, vector<32x32xf32>
    %c256 = arith.constant 256 : index
    %c0_5 = arith.constant 0 : index
    %5 = vector.load %arg1[%c256, %c0_5] : memref<296x128xf32, #tpu.memory_space<vmem>>, vector<32x32xf32>
    %c0_6 = arith.constant 0 : index
    %c64_7 = arith.constant 64 : index
    %6 = vector.load %arg1[%c0_6, %c64_7] : memref<296x128xf32, #tpu.memory_space<vmem>>, vector<64x1xf32>
    %c288 = arith.constant 288 : index
    %c0_8 = arith.constant 0 : index
    %7 = vector.load %arg1[%c288, %c0_8] : memref<296x128xf32, #tpu.memory_space<vmem>>, vector<1x32xf32>
    %cst = arith.constant dense<0.000000e+00> : vector<64x64xf32>
    %8 = tpu.matmul %0, %1, %cst {dimension_numbers = #tpu.dot_dimension_numbers<[1], [0], [0], [1], [0, 0, 1, 1], [], []>} : vector<64x64xf32>, vector<64x64xf32>, vector<64x64xf32> -> vector<64x64xf32>
    %cst_9 = arith.constant dense<0.000000e+00> : vector<64x64xf32>
    %9 = tpu.matmul %8, %0, %cst_9 {dimension_numbers = #tpu.dot_dimension_numbers<[1], [1], [0], [0], [0, 0, 1, 0], [], []>} : vector<64x64xf32>, vector<64x64xf32>, vector<64x64xf32> -> vector<64x64xf32>
    %cst_10 = arith.constant dense<0.000000e+00> : vector<64x32xf32>
    %10 = tpu.matmul %2, %4, %cst_10 {dimension_numbers = #tpu.dot_dimension_numbers<[1], [0], [0], [1], [0, 0, 1, 1], [], []>} : vector<64x32xf32>, vector<32x32xf32>, vector<64x32xf32> -> vector<64x32xf32>
    %cst_11 = arith.constant dense<0.000000e+00> : vector<64x64xf32>
    %11 = tpu.matmul %10, %2, %cst_11 {dimension_numbers = #tpu.dot_dimension_numbers<[1], [1], [0], [0], [0, 0, 1, 0], [], []>} : vector<64x32xf32>, vector<64x32xf32>, vector<64x64xf32> -> vector<64x64xf32>
    %12 = arith.addf %9, %11 : vector<64x64xf32>
    %cst_12 = arith.constant dense<0.000000e+00> : vector<32x64xf32>
    %13 = tpu.matmul %3, %12, %cst_12 {dimension_numbers = #tpu.dot_dimension_numbers<[1], [0], [0], [1], [0, 0, 1, 1], [], []>} : vector<32x64xf32>, vector<64x64xf32>, vector<32x64xf32> -> vector<32x64xf32>
    %cst_13 = arith.constant dense<0.000000e+00> : vector<32x32xf32>
    %14 = tpu.matmul %13, %3, %cst_13 {dimension_numbers = #tpu.dot_dimension_numbers<[1], [1], [0], [0], [0, 0, 1, 0], [], []>} : vector<32x64xf32>, vector<32x64xf32>, vector<32x32xf32> -> vector<32x32xf32>
    %15 = arith.addf %14, %5 : vector<32x32xf32>
    %16 = math.absf %15 : vector<32x32xf32>
    %cst_14 = arith.constant dense<0.000000e+00> : vector<32xf32>
    %17 = vector.multi_reduction <add>, %16, %cst_14 [1] : vector<32x32xf32> to vector<32xf32>
    %18 = vector.shape_cast %17 : vector<32xf32> to vector<32x1xf32>
    %cst_15 = arith.constant dense<0xFF800000> : vector<1xf32>
    %19 = vector.multi_reduction <maximumf>, %18, %cst_15 [0] : vector<32x1xf32> to vector<1xf32>
    %20 = vector.shape_cast %19 : vector<1xf32> to vector<1x1xf32>
    %21 = tpu.reciprocal %20 {approx = true} : vector<1x1xf32> -> vector<1x1xf32>
    %22 = tpu.iota {dimensions = array<i32: 0>} : vector<32x32xi32>
    %23 = tpu.iota {dimensions = array<i32: 1>} : vector<32x32xi32>
    %24 = arith.cmpi eq, %22, %23 : vector<32x32xi32>
    %25 = arith.extui %24 : vector<32x32xi1> to vector<32x32xi32>
    %26 = arith.sitofp %25 : vector<32x32xi32> to vector<32x32xf32>
    %27 = vector.broadcast %21 : vector<1x1xf32> to vector<32x32xf32>
    %28 = arith.mulf %27, %26 : vector<32x32xf32>
    %29 = arith.truncf %15 : vector<32x32xf32> to vector<32x32xbf16>
    %c0_i32 = arith.constant 0 : i32
    %30 = arith.truncf %28 : vector<32x32xf32> to vector<32x32xbf16>
    %cst_16 = arith.constant dense<0.000000e+00> : vector<32x32xf32>
    %31 = tpu.matmul %29, %30, %cst_16 {dimension_numbers = #tpu.dot_dimension_numbers<[1], [0], [0], [1], [0, 0, 1, 1], [], []>} : vector<32x32xbf16>, vector<32x32xbf16>, vector<32x32xf32> -> vector<32x32xf32>
    %32 = arith.truncf %31 : vector<32x32xf32> to vector<32x32xbf16>
    %cst_17 = arith.constant dense<0.000000e+00> : vector<32x32xf32>
    %33 = tpu.matmul %30, %32, %cst_17 {dimension_numbers = #tpu.dot_dimension_numbers<[1], [0], [0], [1], [0, 0, 1, 1], [], []>} : vector<32x32xbf16>, vector<32x32xbf16>, vector<32x32xf32> -> vector<32x32xf32>
    %cst_18 = arith.constant 2.000000e+00 : f32
    %34 = vector.broadcast %cst_18 : f32 to vector<32x32xf32>
    %35 = arith.mulf %34, %28 : vector<32x32xf32>
    %36 = arith.subf %35, %33 : vector<32x32xf32>
    %c1_i32 = arith.constant 1 : i32
    %37 = arith.truncf %36 : vector<32x32xf32> to vector<32x32xbf16>
    %cst_19 = arith.constant dense<0.000000e+00> : vector<32x32xf32>
    %38 = tpu.matmul %29, %37, %cst_19 {dimension_numbers = #tpu.dot_dimension_numbers<[1], [0], [0], [1], [0, 0, 1, 1], [], []>} : vector<32x32xbf16>, vector<32x32xbf16>, vector<32x32xf32> -> vector<32x32xf32>
    %39 = arith.truncf %38 : vector<32x32xf32> to vector<32x32xbf16>
    %cst_20 = arith.constant dense<0.000000e+00> : vector<32x32xf32>
    %40 = tpu.matmul %37, %39, %cst_20 {dimension_numbers = #tpu.dot_dimension_numbers<[1], [0], [0], [1], [0, 0, 1, 1], [], []>} : vector<32x32xbf16>, vector<32x32xbf16>, vector<32x32xf32> -> vector<32x32xf32>
    %cst_21 = arith.constant 2.000000e+00 : f32
    %41 = vector.broadcast %cst_21 : f32 to vector<32x32xf32>
    %42 = arith.mulf %41, %36 : vector<32x32xf32>
    %43 = arith.subf %42, %40 : vector<32x32xf32>
    %c2_i32 = arith.constant 2 : i32
    %44 = arith.truncf %43 : vector<32x32xf32> to vector<32x32xbf16>
    %cst_22 = arith.constant dense<0.000000e+00> : vector<32x32xf32>
    %45 = tpu.matmul %29, %44, %cst_22 {dimension_numbers = #tpu.dot_dimension_numbers<[1], [0], [0], [1], [0, 0, 1, 1], [], []>} : vector<32x32xbf16>, vector<32x32xbf16>, vector<32x32xf32> -> vector<32x32xf32>
    %46 = arith.truncf %45 : vector<32x32xf32> to vector<32x32xbf16>
    %cst_23 = arith.constant dense<0.000000e+00> : vector<32x32xf32>
    %47 = tpu.matmul %44, %46, %cst_23 {dimension_numbers = #tpu.dot_dimension_numbers<[1], [0], [0], [1], [0, 0, 1, 1], [], []>} : vector<32x32xbf16>, vector<32x32xbf16>, vector<32x32xf32> -> vector<32x32xf32>
    %cst_24 = arith.constant 2.000000e+00 : f32
    %48 = vector.broadcast %cst_24 : f32 to vector<32x32xf32>
    %49 = arith.mulf %48, %43 : vector<32x32xf32>
    %50 = arith.subf %49, %47 : vector<32x32xf32>
    %c3_i32 = arith.constant 3 : i32
    %51 = arith.truncf %50 : vector<32x32xf32> to vector<32x32xbf16>
    %cst_25 = arith.constant dense<0.000000e+00> : vector<32x32xf32>
    %52 = tpu.matmul %29, %51, %cst_25 {dimension_numbers = #tpu.dot_dimension_numbers<[1], [0], [0], [1], [0, 0, 1, 1], [], []>} : vector<32x32xbf16>, vector<32x32xbf16>, vector<32x32xf32> -> vector<32x32xf32>
    %53 = arith.truncf %52 : vector<32x32xf32> to vector<32x32xbf16>
    %cst_26 = arith.constant dense<0.000000e+00> : vector<32x32xf32>
    %54 = tpu.matmul %51, %53, %cst_26 {dimension_numbers = #tpu.dot_dimension_numbers<[1], [0], [0], [1], [0, 0, 1, 1], [], []>} : vector<32x32xbf16>, vector<32x32xbf16>, vector<32x32xf32> -> vector<32x32xf32>
    %cst_27 = arith.constant 2.000000e+00 : f32
    %55 = vector.broadcast %cst_27 : f32 to vector<32x32xf32>
    %56 = arith.mulf %55, %50 : vector<32x32xf32>
    %57 = arith.subf %56, %54 : vector<32x32xf32>
    %c4_i32 = arith.constant 4 : i32
    %58 = arith.truncf %57 : vector<32x32xf32> to vector<32x32xbf16>
    %cst_28 = arith.constant dense<0.000000e+00> : vector<32x32xf32>
    %59 = tpu.matmul %29, %58, %cst_28 {dimension_numbers = #tpu.dot_dimension_numbers<[1], [0], [0], [1], [0, 0, 1, 1], [], []>} : vector<32x32xbf16>, vector<32x32xbf16>, vector<32x32xf32> -> vector<32x32xf32>
    %60 = arith.truncf %59 : vector<32x32xf32> to vector<32x32xbf16>
    %cst_29 = arith.constant dense<0.000000e+00> : vector<32x32xf32>
    %61 = tpu.matmul %58, %60, %cst_29 {dimension_numbers = #tpu.dot_dimension_numbers<[1], [0], [0], [1], [0, 0, 1, 1], [], []>} : vector<32x32xbf16>, vector<32x32xbf16>, vector<32x32xf32> -> vector<32x32xf32>
    %cst_30 = arith.constant 2.000000e+00 : f32
    %62 = vector.broadcast %cst_30 : f32 to vector<32x32xf32>
    %63 = arith.mulf %62, %57 : vector<32x32xf32>
    %64 = arith.subf %63, %61 : vector<32x32xf32>
    %c5_i32 = arith.constant 5 : i32
    %65 = arith.truncf %64 : vector<32x32xf32> to vector<32x32xbf16>
    %cst_31 = arith.constant dense<0.000000e+00> : vector<32x32xf32>
    %66 = tpu.matmul %29, %65, %cst_31 {dimension_numbers = #tpu.dot_dimension_numbers<[1], [0], [0], [1], [0, 0, 1, 1], [], []>} : vector<32x32xbf16>, vector<32x32xbf16>, vector<32x32xf32> -> vector<32x32xf32>
    %67 = arith.truncf %66 : vector<32x32xf32> to vector<32x32xbf16>
    %cst_32 = arith.constant dense<0.000000e+00> : vector<32x32xf32>
    %68 = tpu.matmul %65, %67, %cst_32 {dimension_numbers = #tpu.dot_dimension_numbers<[1], [0], [0], [1], [0, 0, 1, 1], [], []>} : vector<32x32xbf16>, vector<32x32xbf16>, vector<32x32xf32> -> vector<32x32xf32>
    %cst_33 = arith.constant 2.000000e+00 : f32
    %69 = vector.broadcast %cst_33 : f32 to vector<32x32xf32>
    %70 = arith.mulf %69, %64 : vector<32x32xf32>
    %71 = arith.subf %70, %68 : vector<32x32xf32>
    %c6_i32 = arith.constant 6 : i32
    %72 = arith.truncf %71 : vector<32x32xf32> to vector<32x32xbf16>
    %cst_34 = arith.constant dense<0.000000e+00> : vector<32x32xf32>
    %73 = tpu.matmul %29, %72, %cst_34 {dimension_numbers = #tpu.dot_dimension_numbers<[1], [0], [0], [1], [0, 0, 1, 1], [], []>} : vector<32x32xbf16>, vector<32x32xbf16>, vector<32x32xf32> -> vector<32x32xf32>
    %74 = arith.truncf %73 : vector<32x32xf32> to vector<32x32xbf16>
    %cst_35 = arith.constant dense<0.000000e+00> : vector<32x32xf32>
    %75 = tpu.matmul %72, %74, %cst_35 {dimension_numbers = #tpu.dot_dimension_numbers<[1], [0], [0], [1], [0, 0, 1, 1], [], []>} : vector<32x32xbf16>, vector<32x32xbf16>, vector<32x32xf32> -> vector<32x32xf32>
    %cst_36 = arith.constant 2.000000e+00 : f32
    %76 = vector.broadcast %cst_36 : f32 to vector<32x32xf32>
    %77 = arith.mulf %76, %71 : vector<32x32xf32>
    %78 = arith.subf %77, %75 : vector<32x32xf32>
    %c7_i32 = arith.constant 7 : i32
    %79 = arith.truncf %78 : vector<32x32xf32> to vector<32x32xbf16>
    %cst_37 = arith.constant dense<0.000000e+00> : vector<32x32xf32>
    %80 = tpu.matmul %29, %79, %cst_37 {dimension_numbers = #tpu.dot_dimension_numbers<[1], [0], [0], [1], [0, 0, 1, 1], [], []>} : vector<32x32xbf16>, vector<32x32xbf16>, vector<32x32xf32> -> vector<32x32xf32>
    %81 = arith.truncf %80 : vector<32x32xf32> to vector<32x32xbf16>
    %cst_38 = arith.constant dense<0.000000e+00> : vector<32x32xf32>
    %82 = tpu.matmul %79, %81, %cst_38 {dimension_numbers = #tpu.dot_dimension_numbers<[1], [0], [0], [1], [0, 0, 1, 1], [], []>} : vector<32x32xbf16>, vector<32x32xbf16>, vector<32x32xf32> -> vector<32x32xf32>
    %cst_39 = arith.constant 2.000000e+00 : f32
    %83 = vector.broadcast %cst_39 : f32 to vector<32x32xf32>
    %84 = arith.mulf %83, %78 : vector<32x32xf32>
    %85 = arith.subf %84, %82 : vector<32x32xf32>
    %c0_i32_40 = arith.constant 0 : i32
    %cst_41 = arith.constant 2.000000e+00 : f32
    %86 = vector.broadcast %cst_41 : f32 to vector<32x32xf32>
    %87 = arith.mulf %86, %85 : vector<32x32xf32>
    %cst_42 = arith.constant dense<0.000000e+00> : vector<32x32xf32>
    %88 = tpu.matmul %15, %85, %cst_42 {dimension_numbers = #tpu.dot_dimension_numbers<[1], [0], [0], [1], [0, 0, 1, 1], [], []>} : vector<32x32xf32>, vector<32x32xf32>, vector<32x32xf32> -> vector<32x32xf32>
    %cst_43 = arith.constant dense<0.000000e+00> : vector<32x32xf32>
    %89 = tpu.matmul %85, %88, %cst_43 {dimension_numbers = #tpu.dot_dimension_numbers<[1], [0], [0], [1], [0, 0, 1, 1], [], []>} : vector<32x32xf32>, vector<32x32xf32>, vector<32x32xf32> -> vector<32x32xf32>
    %90 = arith.subf %87, %89 : vector<32x32xf32>
    %c1_i32_44 = arith.constant 1 : i32
    %cst_45 = arith.constant 2.000000e+00 : f32
    %91 = vector.broadcast %cst_45 : f32 to vector<32x32xf32>
    %92 = arith.mulf %91, %90 : vector<32x32xf32>
    %cst_46 = arith.constant dense<0.000000e+00> : vector<32x32xf32>
    %93 = tpu.matmul %15, %90, %cst_46 {dimension_numbers = #tpu.dot_dimension_numbers<[1], [0], [0], [1], [0, 0, 1, 1], [], []>} : vector<32x32xf32>, vector<32x32xf32>, vector<32x32xf32> -> vector<32x32xf32>
    %cst_47 = arith.constant dense<0.000000e+00> : vector<32x32xf32>
    %94 = tpu.matmul %90, %93, %cst_47 {dimension_numbers = #tpu.dot_dimension_numbers<[1], [0], [0], [1], [0, 0, 1, 1], [], []>} : vector<32x32xf32>, vector<32x32xf32>, vector<32x32xf32> -> vector<32x32xf32>
    %95 = arith.subf %92, %94 : vector<32x32xf32>
    %cst_48 = arith.constant dense<0.000000e+00> : vector<64x32xf32>
    %96 = tpu.matmul %12, %3, %cst_48 {dimension_numbers = #tpu.dot_dimension_numbers<[1], [1], [0], [0], [0, 0, 1, 0], [], []>} : vector<64x64xf32>, vector<32x64xf32>, vector<64x32xf32> -> vector<64x32xf32>
    %cst_49 = arith.constant dense<0.000000e+00> : vector<64x32xf32>
    %97 = tpu.matmul %96, %95, %cst_49 {dimension_numbers = #tpu.dot_dimension_numbers<[1], [0], [0], [1], [0, 0, 1, 1], [], []>} : vector<64x32xf32>, vector<32x32xf32>, vector<64x32xf32> -> vector<64x32xf32>
    %98 = vector.broadcast %7 : vector<1x32xf32> to vector<64x32xf32>
    %99 = arith.mulf %97, %98 : vector<64x32xf32>
    %cst_50 = arith.constant dense<0.000000e+00> : vector<64xf32>
    %100 = vector.multi_reduction <add>, %99, %cst_50 [1] : vector<64x32xf32> to vector<64xf32>
    %101 = vector.shape_cast %100 : vector<64xf32> to vector<64x1xf32>
    %102 = arith.addf %6, %101 : vector<64x1xf32>
    %103 = tpu.iota {dimensions = array<i32: 0>} : vector<64x64xi32>
    %104 = tpu.iota {dimensions = array<i32: 1>} : vector<64x64xi32>
    %105 = arith.cmpi eq, %103, %104 : vector<64x64xi32>
    %106 = arith.extui %105 : vector<64x64xi1> to vector<64x64xi32>
    %107 = arith.sitofp %106 : vector<64x64xi32> to vector<64x64xf32>
    %cst_51 = arith.constant dense<0.000000e+00> : vector<64x64xf32>
    %108 = tpu.matmul %97, %3, %cst_51 {dimension_numbers = #tpu.dot_dimension_numbers<[1], [0], [0], [1], [0, 0, 1, 1], [], []>} : vector<64x32xf32>, vector<32x64xf32>, vector<64x64xf32> -> vector<64x64xf32>
    %109 = arith.subf %107, %108 : vector<64x64xf32>
    %cst_52 = arith.constant dense<0.000000e+00> : vector<64x64xf32>
    %110 = tpu.matmul %109, %12, %cst_52 {dimension_numbers = #tpu.dot_dimension_numbers<[1], [0], [0], [1], [0, 0, 1, 1], [], []>} : vector<64x64xf32>, vector<64x64xf32>, vector<64x64xf32> -> vector<64x64xf32>
    %cst_53 = arith.constant dense<0.000000e+00> : vector<64x64xf32>
    %111 = tpu.matmul %110, %109, %cst_53 {dimension_numbers = #tpu.dot_dimension_numbers<[1], [1], [0], [0], [0, 0, 1, 0], [], []>} : vector<64x64xf32>, vector<64x64xf32>, vector<64x64xf32> -> vector<64x64xf32>
    %cst_54 = arith.constant dense<0.000000e+00> : vector<64x32xf32>
    %112 = tpu.matmul %97, %5, %cst_54 {dimension_numbers = #tpu.dot_dimension_numbers<[1], [0], [0], [1], [0, 0, 1, 1], [], []>} : vector<64x32xf32>, vector<32x32xf32>, vector<64x32xf32> -> vector<64x32xf32>
    %cst_55 = arith.constant dense<0.000000e+00> : vector<64x64xf32>
    %113 = tpu.matmul %112, %97, %cst_55 {dimension_numbers = #tpu.dot_dimension_numbers<[1], [1], [0], [0], [0, 0, 1, 0], [], []>} : vector<64x32xf32>, vector<64x32xf32>, vector<64x64xf32> -> vector<64x64xf32>
    %114 = arith.addf %111, %113 : vector<64x64xf32>
    %115 = vector.shape_cast %102 : vector<64x1xf32> to vector<64x1xf32>
    %116 = vector.broadcast %115 : vector<64x1xf32> to vector<64x64xf32>
    %117 = tpu.concatenate %114, %116 in 1 : vector<64x64xf32>, vector<64x64xf32> -> vector<64x128xf32>
    %c0_56 = arith.constant 0 : index
    %c0_57 = arith.constant 0 : index
    %118 = vector.load %arg2[%c0_56, %c0_57] : memref<64x128xf32, #tpu.memory_space<vmem>>, vector<64x128xf32>
    tpu.vector_store %arg2[%c0_56, %c0_57], %117 {strides = array<i32>} : memref<64x128xf32, #tpu.memory_space<vmem>>, vector<64x128xf32>,
    return
  }
  func.func @transform_0(%arg0: i32) -> (i32, i32) {
    %c0_i32 = arith.constant 0 : i32
    %c0_i32_0 = arith.constant 0 : i32
    %c0_i32_1 = arith.constant 0 : i32
    return %c0_i32, %c0_i32_0 : i32, i32
  }
  func.func @transform_1(%arg0: i32) -> (i32, i32) {
    %c0_i32 = arith.constant 0 : i32
    %c0_i32_0 = arith.constant 0 : i32
    %c0_i32_1 = arith.constant 0 : i32
    return %c0_i32, %c0_i32_0 : i32, i32
  }
}

</mosaic_0001>

<llo_original>
// kernel: squeeze.1
$region0: #{squeeze.1}
  %s0 = inlined_call_operand.vmem [shape: f32[64], index: 0, kind: input, shape index: {}]
  %s1 = inlined_call_operand.hbm [shape: f32[4,16], index: 1, kind: output, shape index: {}]
  $region1: #{squeeze.1} parent=0
    #allocation0 [shape = 'u8[2048]{0}', space=vmem, size = 0x800, scoped, tag = 'operand span for operand 1']
    #allocation1 [shape = 's32[1]{0}', space=sflag, size = 0x4, scoped, tag = 'scoped memory for squeeze.1']
    #allocation2 [shape = 'u8[4096]{0}', space=vmem, size = 0x1000, scoped, tag = 'scoped mem for output reshape']
    #allocation3 [shape = 'u8[4096]{0}', space=vmem, size = 0x1000, scoped, tag = 'scoped mem for input reshape']
    %2 = vsyncpa [#allocation1], 0
    %s4 = ssub.s32 2, 1
    %v5 = vld [vmem:[%s0] sm:%s4]
    %6 = vst [vmem:[#allocation3] sm:%s4] %v5
    %v7 = vld [vmem:[#allocation3] sm:$0x1]
    %vm8 = vcmask 130048
    %9 = vst.msk [vmem:[#allocation2] sm:$0x1] %vm8, %v7
    %v10 = vld [vmem:[#allocation3] sm:$0x1]
    %11 = vrot.lane.b32.xlu0 %v10, 112
    %v12 = vpop.permute.xlu0 %11
    %vm13 = vcmask 130048
    %s14 = scalar_lea.vmem [#allocation2], 1
    %15 = vst.msk [vmem:[%s14] sm:$0x1] %vm13, %v12
    %v16 = vld [vmem:[#allocation3] sm:$0x1]
    %17 = vrot.lane.b32.xlu0 %v16, 96
    %v18 = vpop.permute.xlu0 %17
    %vm19 = vcmask 130048
    %s20 = scalar_lea.vmem [#allocation2], 2
    %21 = vst.msk [vmem:[%s20] sm:$0x1] %vm19, %v18
    %v22 = vld [vmem:[#allocation3] sm:$0x1]
    %23 = vrot.lane.b32.xlu0 %v22, 80
    %v24 = vpop.permute.xlu0 %23
    %vm25 = vcmask 130048
    %s26 = scalar_lea.vmem [#allocation2], 3
    %27 = vst.msk [vmem:[%s26] sm:$0x1] %vm25, %v24
    %s29 = ssub.s32 16, 1
    %v30 = vld [vmem:[#allocation2] sm:%s29]
    %s32 = ssub.s32 16, 1
    %33 = vst [vmem:[#allocation0] sm:%s32] %v30
    %35 = vsyncadd [#allocation1], 0
    %s37 = sshll.u32 [#allocation0], 4
    %s38 = int_to_ptr.vmem [resolvable:$true] %s37
    %s39 = sshll.u32 %s1, 4
    %s40 = int_to_ptr.hbm [resolvable:$true] %s39
    %42 = dma.vmem_to_hbm [thread:$0]  %s38, 64, %s40, [#allocation1]
    %44 = dma.done [#allocation1], 64
    %45 = vsyncpa [#allocation1], 1

// kernel: ekf_update_pallas.1
$region0: #{ekf_update_pallas.1}
  #allocation0 [shape = 'u32[]', space=smem, size = 0x4, offset = 0x4, fixed_abs, tag = 'smem constant byte address 0x4 - core index']
  #allocation1 [shape = 'u32[72,128]{1,0:T(1,128)}', space=vmem, size = 0x9000, scoped, tag = 'internal scratch']
  %s0 = inlined_call_operand.vmem [shape: f32[296,128], index: 0, kind: input, shape index: {}]
  %s1 = inlined_call_operand.vmem [shape: f32[64,128], index: 1, kind: output, shape index: {}]
  %s2 = sld [smem:[#allocation0]]
  $region14: #{ekf_update_pallas.1} parent=0
    _
  %s4 = ssub.s32 1, %s2
  %s5 = scalar_select 0, %s4, %s2
  // Predicated region
  $region2: #{ekf_update_pallas.1} parent=0 // pred_check
    _
  $region3: #{ekf_update_pallas.1} parent=0 // pred_check_branch
    %7 = sbr.rel (0) target = $region5
  $region4: #{ekf_update_pallas.1} parent=0 // pred_region
    _
  $region5: #{ekf_update_pallas.1} parent=0 // pred_fallthru
    _
  %v9 = vld [vmem:[%s0] sm:$0xff]
  %v10 = vld [vmem:[%s0 + $0x8] sm:$0xff]
  %v11 = vld [vmem:[%s0 + $0x10] sm:$0xff]
  %v12 = vld [vmem:[%s0 + $0x18] sm:$0xff]
  %v13 = vld [vmem:[%s0 + $0x20] sm:$0xff]
  %v14 = vld [vmem:[%s0 + $0x28] sm:$0xff]
  %v15 = vld [vmem:[%s0 + $0x30] sm:$0xff]
  %v16 = vld [vmem:[%s0 + $0x38] sm:$0xff]
  %v17 = vld [vmem:[%s0 + $0x40] sm:$0xff]
  %v18 = vld [vmem:[%s0 + $0x48] sm:$0xff]
  %v19 = vld [vmem:[%s0 + $0x50] sm:$0xff]
  %v20 = vld [vmem:[%s0 + $0x58] sm:$0xff]
  %v21 = vld [vmem:[%s0 + $0x60] sm:$0xff]
  %v22 = vld [vmem:[%s0 + $0x68] sm:$0xff]
  %v23 = vld [vmem:[%s0 + $0x70] sm:$0xff]
  %v24 = vld [vmem:[%s0 + $0x78] sm:$0xff]
  %v25 = vld [vmem:[%s0 + $0x80] sm:$0xff]
  %v26 = vld [vmem:[%s0 + $0x88] sm:$0xff]
  %v27 = vld [vmem:[%s0 + $0x90] sm:$0xff]
  %v28 = vld [vmem:[%s0 + $0x98] sm:$0xff]
  %v29 = vld [vmem:[%s0 + $0xa0] sm:$0xff]
  %v30 = vld [vmem:[%s0 + $0xa8] sm:$0xff]
  %v31 = vld [vmem:[%s0 + $0xb0] sm:$0xff]
  %v32 = vld [vmem:[%s0 + $0xb8] sm:$0xff]
  %v33 = vld [vmem:[%s0 + $0xc0] sm:$0xff]
  %v34 = vld [vmem:[%s0 + $0xc8] sm:$0xff]
  %v35 = vld [vmem:[%s0 + $0xd0] sm:$0xff]
  %v36 = vld [vmem:[%s0 + $0xd8] sm:$0xff]
  %v37 = vld [vmem:[%s0 + $0xe0] sm:$0xff]
  %v38 = vld [vmem:[%s0 + $0xe8] sm:$0xff]
  %v39 = vld [vmem:[%s0 + $0xf0] sm:$0xff]
  %v40 = vld [vmem:[%s0 + $0xf8] sm:$0xff]
  %v41 = vld [vmem:[%s0 + $0x100] sm:$0xff]
  %v42 = vld [vmem:[%s0 + $0x108] sm:$0xff]
  %v43 = vld [vmem:[%s0 + $0x110] sm:$0xff]
  %v44 = vld [vmem:[%s0 + $0x118] sm:$0xff]
  %v45 = vld [vmem:[%s0 + $0x120] sm:$0x1]
  %vm46 = vcmask 523264
  %v48 = vsel %vm46, %v9, 0
  %v51 = vsel %vm46, %v10, 0
  %v54 = vsel %vm46, %v11, 0
  %v57 = vsel %vm46, %v12, 0
  %v60 = vsel %vm46, %v13, 0
  %v63 = vsel %vm46, %v14, 0
  %v66 = vsel %vm46, %v15, 0
  %v69 = vsel %vm46, %v16, 0
  %71 = vmatpush.msra.mxu0 0.0
  %72 = vmatpush.msra.mxu0 0.0
  %73 = vmatpush.msra.mxu0 0.0
  %74 = vmatpush.msra.mxu0 0.0
  %75 = vmatpush.msra.mxu0 0.0
  %76 = vmatpush.msra.mxu0 0.0
  %77 = vmatpush.msra.mxu0 0.0
  %78 = vmatpush.msra.mxu0 0.0
  %79 = vmatpush.msra.mxu0 %v24
  %80 = vmatpush.msra.mxu0 %v23
  %81 = vmatpush.msra.mxu0 %v22
  %82 = vmatpush.msra.mxu0 %v21
  %83 = vmatpush.msra.mxu0 %v20
  %84 = vmatpush.msra.mxu0 %v19
  %85 = vmatpush.msra.mxu0 %v18
  %86 = vmatpush.msra.mxu0 %v17
  %87 = vmatmul.f32.gmra.mxu0 %v48
  %v88 = vpop.f32.mrf.mxu0
  %v89 = vadd.f32 0.0, %v88
  %90 = vmatmul.f32.gmra.mxu0 %v51
  %v91 = vpop.f32.mrf.mxu0
  %v92 = vadd.f32 0.0, %v91
  %93 = vmatmul.f32.gmra.mxu0 %v54
  %v94 = vpop.f32.mrf.mxu0
  %v95 = vadd.f32 0.0, %v94
  %96 = vmatmul.f32.gmra.mxu0 %v57
  %v97 = vpop.f32.mrf.mxu0
  %v98 = vadd.f32 0.0, %v97
  %99 = vmatmul.f32.gmra.mxu0 %v60
  %v100 = vpop.f32.mrf.mxu0
  %v101 = vadd.f32 0.0, %v100
  %102 = vmatmul.f32.gmra.mxu0 %v63
  %v103 = vpop.f32.mrf.mxu0
  %v104 = vadd.f32 0.0, %v103
  %105 = vmatmul.f32.gmra.mxu0 %v66
  %v106 = vpop.f32.mrf.mxu0
  %v107 = vadd.f32 0.0, %v106
  %108 = vmatmul.f32.gmra.mxu0 %v69
  %v109 = vpop.f32.mrf.mxu0
  %v110 = vadd.f32 0.0, %v109
  %111 = vdwg.mxu0
  %vm112 = vcmask 261120
  %v114 = vsel %vm112, %v25, 0
  %v117 = vsel %vm112, %v26, 0
  %v120 = vsel %vm112, %v27, 0
  %v123 = vsel %vm112, %v28, 0
  %v126 = vsel %vm112, %v29, 0
  %v129 = vsel %vm112, %v30, 0
  %v132 = vsel %vm112, %v31, 0
  %v135 = vsel %vm112, %v32, 0
  %137 = vmatpush.msra.mxu0 0.0
  %138 = vmatpush.msra.mxu0 0.0
  %139 = vmatpush.msra.mxu0 0.0
  %140 = vmatpush.msra.mxu0 0.0
  %141 = vmatpush.msra.mxu0 0.0
  %142 = vmatpush.msra.mxu0 0.0
  %143 = vmatpush.msra.mxu0 0.0
  %144 = vmatpush.msra.mxu0 0.0
  %145 = vmatpush.msra.mxu0 0.0
  %146 = vmatpush.msra.mxu0 0.0
  %147 = vmatpush.msra.mxu0 0.0
  %148 = vmatpush.msra.mxu0 0.0
  %149 = vmatpush.msra.mxu0 %v40
  %150 = vmatpush.msra.mxu0 %v39
  %151 = vmatpush.msra.mxu0 %v38
  %152 = vmatpush.msra.mxu0 %v37
  %153 = vmatmul.f32.gmra.mxu0 %v114
  %v154 = vpop.f32.mrf.mxu0
  %v155 = vadd.f32 0.0, %v154
  %156 = vmatmul.f32.gmra.mxu0 %v117
  %v157 = vpop.f32.mrf.mxu0
  %v158 = vadd.f32 0.0, %v157
  %159 = vmatmul.f32.gmra.mxu0 %v120
  %v160 = vpop.f32.mrf.mxu0
  %v161 = vadd.f32 0.0, %v160
  %162 = vmatmul.f32.gmra.mxu0 %v123
  %v163 = vpop.f32.mrf.mxu0
  %v164 = vadd.f32 0.0, %v163
  %165 = vmatmul.f32.gmra.mxu0 %v126
  %v166 = vpop.f32.mrf.mxu0
  %v167 = vadd.f32 0.0, %v166
  %168 = vmatmul.f32.gmra.mxu0 %v129
  %v169 = vpop.f32.mrf.mxu0
  %v170 = vadd.f32 0.0, %v169
  %171 = vmatmul.f32.gmra.mxu0 %v132
  %v172 = vpop.f32.mrf.mxu0
  %v173 = vadd.f32 0.0, %v172
  %174 = vmatmul.f32.gmra.mxu0 %v135
  %v175 = vpop.f32.mrf.mxu0
  %v176 = vadd.f32 0.0, %v175
  %177 = vdwg.mxu0
  %v179 = vsel %vm112, %v155, 0
  %v182 = vsel %vm112, %v158, 0
  %v185 = vsel %vm112, %v161, 0
  %v188 = vsel %vm112, %v164, 0
  %v191 = vsel %vm112, %v167, 0
  %v194 = vsel %vm112, %v170, 0
  %v197 = vsel %vm112, %v173, 0
  %v200 = vsel %vm112, %v176, 0
  %202 = vmatpush.xpose.msra.mxu0 0.0
  %203 = vmatpush.xpose.msra.mxu0 0.0
  %204 = vmatpush.xpose.msra.mxu0 0.0
  %205 = vmatpush.xpose.msra.mxu0 0.0
  %206 = vmatpush.xpose.msra.mxu0 0.0
  %207 = vmatpush.xpose.msra.mxu0 0.0
  %208 = vmatpush.xpose.msra.mxu0 0.0
  %209 = vmatpush.xpose.msra.mxu0 0.0
  %210 = vmatpush.xpose.msra.mxu0 %v135
  %211 = vmatpush.xpose.msra.mxu0 %v132
  %212 = vmatpush.xpose.msra.mxu0 %v129
  %213 = vmatpush.xpose.msra.mxu0 %v126
  %214 = vmatpush.xpose.msra.mxu0 %v123
  %215 = vmatpush.xpose.msra.mxu0 %v120
  %216 = vmatpush.xpose.msra.mxu0 %v117
  %217 = vmatpush.xpose.msra.mxu0 %v114
  %218 = vmatmul.f32.gmra.mxu0 %v179
  %v219 = vpop.f32.mrf.mxu0
  %v220 = vadd.f32 0.0, %v219
  %221 = vmatmul.f32.gmra.mxu0 %v182
  %v222 = vpop.f32.mrf.mxu0
  %v223 = vadd.f32 0.0, %v222
  %224 = vmatmul.f32.gmra.mxu0 %v185
  %v225 = vpop.f32.mrf.mxu0
  %v226 = vadd.f32 0.0, %v225
  %227 = vmatmul.f32.gmra.mxu0 %v188
  %v228 = vpop.f32.mrf.mxu0
  %v229 = vadd.f32 0.0, %v228
  %230 = vmatmul.f32.gmra.mxu0 %v191
  %v231 = vpop.f32.mrf.mxu0
  %v232 = vadd.f32 0.0, %v231
  %233 = vmatmul.f32.gmra.mxu0 %v194
  %v234 = vpop.f32.mrf.mxu0
  %v235 = vadd.f32 0.0, %v234
  %236 = vmatmul.f32.gmra.mxu0 %v197
  %v237 = vpop.f32.mrf.mxu0
  %v238 = vadd.f32 0.0, %v237
  %239 = vmatmul.f32.gmra.mxu0 %v200
  %v240 = vpop.f32.mrf.mxu0
  %v241 = vadd.f32 0.0, %v240
  %242 = vdwg.mxu0
  %v244 = vsel %vm46, %v89, 0
  %v247 = vsel %vm46, %v92, 0
  %v250 = vsel %vm46, %v95, 0
  %v253 = vsel %vm46, %v98, 0
  %v256 = vsel %vm46, %v101, 0
  %v259 = vsel %vm46, %v104, 0
  %v262 = vsel %vm46, %v107, 0
  %v265 = vsel %vm46, %v110, 0
  %267 = vmatpush.xpose.msra.mxu0 0.0
  %268 = vmatpush.xpose.msra.mxu0 0.0
  %269 = vmatpush.xpose.msra.mxu0 0.0
  %270 = vmatpush.xpose.msra.mxu0 0.0
  %271 = vmatpush.xpose.msra.mxu0 0.0
  %272 = vmatpush.xpose.msra.mxu0 0.0
  %273 = vmatpush.xpose.msra.mxu0 0.0
  %274 = vmatpush.xpose.msra.mxu0 0.0
  %275 = vmatpush.xpose.msra.mxu0 %v69
  %276 = vmatpush.xpose.msra.mxu0 %v66
  %277 = vmatpush.xpose.msra.mxu0 %v63
  %278 = vmatpush.xpose.msra.mxu0 %v60
  %279 = vmatpush.xpose.msra.mxu0 %v57
  %280 = vmatpush.xpose.msra.mxu0 %v54
  %281 = vmatpush.xpose.msra.mxu0 %v51
  %282 = vmatpush.xpose.msra.mxu0 %v48
  %283 = vmatmul.f32.gmra.mxu0 %v244
  %v284 = vpop.f32.mrf.mxu0
  %v285 = vadd.f32 %v220, %v284
  %286 = vmatmul.f32.gmra.mxu0 %v247
  %v287 = vpop.f32.mrf.mxu0
  %v288 = vadd.f32 %v223, %v287
  %289 = vmatmul.f32.gmra.mxu0 %v250
  %v290 = vpop.f32.mrf.mxu0
  %v291 = vadd.f32 %v226, %v290
  %292 = vmatmul.f32.gmra.mxu0 %v253
  %v293 = vpop.f32.mrf.mxu0
  %v294 = vadd.f32 %v229, %v293
  %295 = vmatmul.f32.gmra.mxu0 %v256
  %v296 = vpop.f32.mrf.mxu0
  %v297 = vadd.f32 %v232, %v296
  %298 = vmatmul.f32.gmra.mxu0 %v259
  %v299 = vpop.f32.mrf.mxu0
  %v300 = vadd.f32 %v235, %v299
  %301 = vmatmul.f32.gmra.mxu0 %v262
  %v302 = vpop.f32.mrf.mxu0
  %v303 = vadd.f32 %v238, %v302
  %304 = vmatmul.f32.gmra.mxu0 %v265
  %v305 = vpop.f32.mrf.mxu0
  %v306 = vadd.f32 %v241, %v305
  %307 = vdwg.mxu0
  %v309 = vsel %vm46, %v33, 0
  %v312 = vsel %vm46, %v34, 0
  %v315 = vsel %vm46, %v35, 0
  %v318 = vsel %vm46, %v36, 0
  %320 = vmatpush.msra.mxu0 0.0
  %321 = vmatpush.msra.mxu0 0.0
  %322 = vmatpush.msra.mxu0 0.0
  %323 = vmatpush.msra.mxu0 0.0
  %324 = vmatpush.msra.mxu0 0.0
  %325 = vmatpush.msra.mxu0 0.0
  %326 = vmatpush.msra.mxu0 0.0
  %327 = vmatpush.msra.mxu0 0.0
  %328 = vmatpush.msra.mxu0 %v306
  %329 = vmatpush.msra.mxu0 %v303
  %330 = vmatpush.msra.mxu0 %v300
  %331 = vmatpush.msra.mxu0 %v297
  %332 = vmatpush.msra.mxu0 %v294
  %333 = vmatpush.msra.mxu0 %v291
  %334 = vmatpush.msra.mxu0 %v288
  %335 = vmatpush.msra.mxu0 %v285
  %336 = vmatmul.f32.gmra.mxu0 %v309
  %v337 = vpop.f32.mrf.mxu0
  %v338 = vadd.f32 0.0, %v337
  %339 = vmatmul.f32.gmra.mxu0 %v312
  %v340 = vpop.f32.mrf.mxu0
  %v341 = vadd.f32 0.0, %v340
  %342 = vmatmul.f32.gmra.mxu0 %v315
  %v343 = vpop.f32.mrf.mxu0
  %v344 = vadd.f32 0.0, %v343
  %345 = vmatmul.f32.gmra.mxu0 %v318
  %v346 = vpop.f32.mrf.mxu0
  %v347 = vadd.f32 0.0, %v346
  %348 = vdwg.mxu0
  %v350 = vsel %vm46, %v338, 0
  %v353 = vsel %vm46, %v341, 0
  %v356 = vsel %vm46, %v344, 0
  %v359 = vsel %vm46, %v347, 0
  %361 = vmatpush.xpose.msra.mxu0 0.0
  %362 = vmatpush.xpose.msra.mxu0 0.0
  %363 = vmatpush.xpose.msra.mxu0 0.0
  %364 = vmatpush.xpose.msra.mxu0 0.0
  %365 = vmatpush.xpose.msra.mxu0 0.0
  %366 = vmatpush.xpose.msra.mxu0 0.0
  %367 = vmatpush.xpose.msra.mxu0 0.0
  %368 = vmatpush.xpose.msra.mxu0 0.0
  %369 = vmatpush.xpose.msra.mxu0 0.0
  %370 = vmatpush.xpose.msra.mxu0 0.0
  %371 = vmatpush.xpose.msra.mxu0 0.0
  %372 = vmatpush.xpose.msra.mxu0 0.0
  %373 = vmatpush.xpose.msra.mxu0 %v318
  %374 = vmatpush.xpose.msra.mxu0 %v315
  %375 = vmatpush.xpose.msra.mxu0 %v312
  %376 = vmatpush.xpose.msra.mxu0 %v309
  %377 = vmatmul.f32.gmra.mxu0 %v350
  %v378 = vpop.f32.mrf.mxu0
  %v379 = vadd.f32 %v41, %v378
  %380 = vmatmul.f32.gmra.mxu0 %v353
  %v381 = vpop.f32.mrf.mxu0
  %v382 = vadd.f32 %v42, %v381
  %383 = vmatmul.f32.gmra.mxu0 %v356
  %v384 = vpop.f32.mrf.mxu0
  %v385 = vadd.f32 %v43, %v384
  %386 = vmatmul.f32.gmra.mxu0 %v359
  %v387 = vpop.f32.mrf.mxu0
  %v388 = vadd.f32 %v44, %v387
  %389 = vdwg.mxu0
  %v390 = vand.u32 2147483647, %v379
  %v391 = vand.u32 2147483647, %v382
  %v392 = vand.u32 2147483647, %v385
  %v393 = vand.u32 2147483647, %v388
  %v394 = vsel %vm112, %v390, 0.0
  %395 = vadd.xlane.f32.xlu0 %v394
  %v396 = vpop.xlane.xlu0 %395
  %v397 = vsel %vm112, %v391, 0.0
  %398 = vadd.xlane.f32.xlu0 %v397
  %v399 = vpop.xlane.xlu0 %398
  %v400 = vsel %vm112, %v392, 0.0
  %401 = vadd.xlane.f32.xlu0 %v400
  %v402 = vpop.xlane.xlu0 %401
  %v403 = vsel %vm112, %v393, 0.0
  %404 = vadd.xlane.f32.xlu0 %v403
  %v405 = vpop.xlane.xlu0 %404
  %v406 = vmax.f32 %v396, %v399
  %v407 = vmax.f32 %v402, %v405
  %v408 = vmax.f32 %v406, %v407
  %v409 = vrot.slane %v408, 4
  %v410 = vmax.f32 %v408, %v409
  %v411 = vrot.slane %v410, 2
  %v412 = vmax.f32 %v410, %v411
  %v413 = vrot.slane %v412, 1
  %v414 = vmax.f32 %v412, %v413
  %v415 = vrcp.pop %v414
  %v416 = vlaneseq
  %v417 = vshrl.u32 %v416, 7
  %v418 = vadd.s32 %v417, 8
  %v419 = vadd.s32 %v417, 16
  %v420 = vadd.s32 %v417, 24
  %v421 = vlaneseq
  %v422 = vand.u32 %v421, 127
  %vm423 = vcmp.eq.s32.totalorder %v417, %v422
  %vm424 = vcmp.eq.s32.totalorder %v418, %v422
  %vm425 = vcmp.eq.s32.totalorder %v419, %v422
  %vm426 = vcmp.eq.s32.totalorder %v420, %v422
  %v427 = vsel %vm423, 1, 0
  %v428 = vsel %vm424, 1, 0
  %v429 = vsel %vm425, 1, 0
  %v430 = vsel %vm426, 1, 0
  %v431 = vcvt.s32.f32 %v427
  %v432 = vcvt.s32.f32 %v428
  %v433 = vcvt.s32.f32 %v429
  %v434 = vcvt.s32.f32 %v430
  %v435 = vmul.f32 %v415, %v431
  %v436 = vmul.f32 %v415, %v432
  %v437 = vmul.f32 %v415, %v433
  %v438 = vmul.f32 %v415, %v434
  %v439 = vpack.c.bf16 %v382, %v379
  %v440 = vpack.c.bf16 %v388, %v385
  %v441 = vpack.c.bf16 %v436, %v435
  %v442 = vpack.c.bf16 %v438, %v437
  %v444 = vsel %vm112, %v439, 0
  %v447 = vsel %vm112, %v440, 0
  %449 = vmatpush.bf16.msra.mxu0 0
  %450 = vmatpush.bf16.msra.mxu0 0
  %451 = vmatpush.bf16.msra.mxu0 0
  %452 = vmatpush.bf16.msra.mxu0 0
  %453 = vmatpush.bf16.msra.mxu0 0
  %454 = vmatpush.bf16.msra.mxu0 0
  %455 = vmatpush.bf16.msra.mxu0 %v442
  %456 = vmatpush.bf16.msra.mxu0 %v441
  %457 = vmatmul.bf16.gmra.mxu0 %v444
  %v458 = vpop.f32.mrf.mxu0
  %v459 = vadd.f32 0.0, %v458
  %v460 = vpop.f32.mrf.mxu0
  %v461 = vadd.f32 0.0, %v460
  %462 = vmatmul.bf16.gmra.mxu0 %v447
  %v463 = vpop.f32.mrf.mxu0
  %v464 = vadd.f32 0.0, %v463
  %v465 = vpop.f32.mrf.mxu0
  %v466 = vadd.f32 0.0, %v465
  %467 = vdwg.mxu0
  %v468 = vpack.c.bf16 %v461, %v459
  %v469 = vpack.c.bf16 %v466, %v464
  %v471 = vsel %vm112, %v441, 0
  %v474 = vsel %vm112, %v442, 0
  %476 = vmatpush.bf16.msra.mxu0 0
  %477 = vmatpush.bf16.msra.mxu0 0
  %478 = vmatpush.bf16.msra.mxu0 0
  %479 = vmatpush.bf16.msra.mxu0 0
  %480 = vmatpush.bf16.msra.mxu0 0
  %481 = vmatpush.bf16.msra.mxu0 0
  %482 = vmatpush.bf16.msra.mxu0 %v469
  %483 = vmatpush.bf16.msra.mxu0 %v468
  %484 = vmatmul.bf16.gmra.mxu0 %v471
  %v485 = vpop.f32.mrf.mxu0
  %v486 = vadd.f32 0.0, %v485
  %v487 = vpop.f32.mrf.mxu0
  %v488 = vadd.f32 0.0, %v487
  %489 = vmatmul.bf16.gmra.mxu0 %v474
  %v490 = vpop.f32.mrf.mxu0
  %v491 = vadd.f32 0.0, %v490
  %v492 = vpop.f32.mrf.mxu0
  %v493 = vadd.f32 0.0, %v492
  %494 = vdwg.mxu0
  %v495 = vmul.f32 %v435, 2.0
  %v496 = vmul.f32 %v436, 2.0
  %v497 = vmul.f32 %v437, 2.0
  %v498 = vmul.f32 %v438, 2.0
  %v499 = vsub.f32 %v495, %v486
  %v500 = vsub.f32 %v496, %v488
  %v501 = vsub.f32 %v497, %v491
  %v502 = vsub.f32 %v498, %v493
  %v503 = vpack.c.bf16 %v500, %v499
  %v504 = vpack.c.bf16 %v502, %v501
  %505 = vmatpush.bf16.msra.mxu0 0
  %506 = vmatpush.bf16.msra.mxu0 0
  %507 = vmatpush.bf16.msra.mxu0 0
  %508 = vmatpush.bf16.msra.mxu0 0
  %509 = vmatpush.bf16.msra.mxu0 0
  %510 = vmatpush.bf16.msra.mxu0 0
  %511 = vmatpush.bf16.msra.mxu0 %v504
  %512 = vmatpush.bf16.msra.mxu0 %v503
  %513 = vmatmul.bf16.gmra.mxu0 %v444
  %v514 = vpop.f32.mrf.mxu0
  %v515 = vadd.f32 0.0, %v514
  %v516 = vpop.f32.mrf.mxu0
  %v517 = vadd.f32 0.0, %v516
  %518 = vmatmul.bf16.gmra.mxu0 %v447
  %v519 = vpop.f32.mrf.mxu0
  %v520 = vadd.f32 0.0, %v519
  %v521 = vpop.f32.mrf.mxu0
  %v522 = vadd.f32 0.0, %v521
  %523 = vdwg.mxu0
  %v524 = vpack.c.bf16 %v517, %v515
  %v525 = vpack.c.bf16 %v522, %v520
  %v527 = vsel %vm112, %v503, 0
  %v530 = vsel %vm112, %v504, 0
  %532 = vmatpush.bf16.msra.mxu0 0
  %533 = vmatpush.bf16.msra.mxu0 0
  %534 = vmatpush.bf16.msra.mxu0 0
  %535 = vmatpush.bf16.msra.mxu0 0
  %536 = vmatpush.bf16.msra.mxu0 0
  %537 = vmatpush.bf16.msra.mxu0 0
  %538 = vmatpush.bf16.msra.mxu0 %v525
  %539 = vmatpush.bf16.msra.mxu0 %v524
  %540 = vmatmul.bf16.gmra.mxu0 %v527
  %v541 = vpop.f32.mrf.mxu0
  %v542 = vadd.f32 0.0, %v541
  %v543 = vpop.f32.mrf.mxu0
  %v544 = vadd.f32 0.0, %v543
  %545 = vmatmul.bf16.gmra.mxu0 %v530
  %v546 = vpop.f32.mrf.mxu0
  %v547 = vadd.f32 0.0, %v546
  %v548 = vpop.f32.mrf.mxu0
  %v549 = vadd.f32 0.0, %v548
  %550 = vdwg.mxu0
  %v551 = vmul.f32 %v499, 2.0
  %v552 = vmul.f32 %v500, 2.0
  %v553 = vmul.f32 %v501, 2.0
  %v554 = vmul.f32 %v502, 2.0
  %v555 = vsub.f32 %v551, %v542
  %v556 = vsub.f32 %v552, %v544
  %v557 = vsub.f32 %v553, %v547
  %v558 = vsub.f32 %v554, %v549
  %v559 = vpack.c.bf16 %v556, %v555
  %v560 = vpack.c.bf16 %v558, %v557
  %561 = vmatpush.bf16.msra.mxu0 0
  %562 = vmatpush.bf16.msra.mxu0 0
  %563 = vmatpush.bf16.msra.mxu0 0
  %564 = vmatpush.bf16.msra.mxu0 0
  %565 = vmatpush.bf16.msra.mxu0 0
  %566 = vmatpush.bf16.msra.mxu0 0
  %567 = vmatpush.bf16.msra.mxu0 %v560
  %568 = vmatpush.bf16.msra.mxu0 %v559
  %569 = vmatmul.bf16.gmra.mxu0 %v444
  %v570 = vpop.f32.mrf.mxu0
  %v571 = vadd.f32 0.0, %v570
  %v572 = vpop.f32.mrf.mxu0
  %v573 = vadd.f32 0.0, %v572
  %574 = vmatmul.bf16.gmra.mxu0 %v447
  %v575 = vpop.f32.mrf.mxu0
  %v576 = vadd.f32 0.0, %v575
  %v577 = vpop.f32.mrf.mxu0
  %v578 = vadd.f32 0.0, %v577
  %579 = vdwg.mxu0
  %v580 = vpack.c.bf16 %v573, %v571
  %v581 = vpack.c.bf16 %v578, %v576
  %v583 = vsel %vm112, %v559, 0
  %v586 = vsel %vm112, %v560, 0
  %588 = vmatpush.bf16.msra.mxu0 0
  %589 = vmatpush.bf16.msra.mxu0 0
  %590 = vmatpush.bf16.msra.mxu0 0
  %591 = vmatpush.bf16.msra.mxu0 0
  %592 = vmatpush.bf16.msra.mxu0 0
  %593 = vmatpush.bf16.msra.mxu0 0
  %594 = vmatpush.bf16.msra.mxu0 %v581
  %595 = vmatpush.bf16.msra.mxu0 %v580
  %596 = vmatmul.bf16.gmra.mxu0 %v583
  %v597 = vpop.f32.mrf.mxu0
  %v598 = vadd.f32 0.0, %v597
  %v599 = vpop.f32.mrf.mxu0
  %v600 = vadd.f32 0.0, %v599
  %601 = vmatmul.bf16.gmra.mxu0 %v586
  %v602 = vpop.f32.mrf.mxu0
  %v603 = vadd.f32 0.0, %v602
  %v604 = vpop.f32.mrf.mxu0
  %v605 = vadd.f32 0.0, %v604
  %606 = vdwg.mxu0
  %v607 = vmul.f32 %v555, 2.0
  %v608 = vmul.f32 %v556, 2.0
  %v609 = vmul.f32 %v557, 2.0
  %v610 = vmul.f32 %v558, 2.0
  %v611 = vsub.f32 %v607, %v598
  %v612 = vsub.f32 %v608, %v600
  %v613 = vsub.f32 %v609, %v603
  %v614 = vsub.f32 %v610, %v605
  %v615 = vpack.c.bf16 %v612, %v611
  %v616 = vpack.c.bf16 %v614, %v613
  %617 = vmatpush.bf16.msra.mxu0 0
  %618 = vmatpush.bf16.msra.mxu0 0
  %619 = vmatpush.bf16.msra.mxu0 0
  %620 = vmatpush.bf16.msra.mxu0 0
  %621 = vmatpush.bf16.msra.mxu0 0
  %622 = vmatpush.bf16.msra.mxu0 0
  %623 = vmatpush.bf16.msra.mxu0 %v616
  %624 = vmatpush.bf16.msra.mxu0 %v615
  %625 = vmatmul.bf16.gmra.mxu0 %v444
  %v626 = vpop.f32.mrf.mxu0
  %v627 = vadd.f32 0.0, %v626
  %v628 = vpop.f32.mrf.mxu0
  %v629 = vadd.f32 0.0, %v628
  %630 = vmatmul.bf16.gmra.mxu0 %v447
  %v631 = vpop.f32.mrf.mxu0
  %v632 = vadd.f32 0.0, %v631
  %v633 = vpop.f32.mrf.mxu0
  %v634 = vadd.f32 0.0, %v633
  %635 = vdwg.mxu0
  %v636 = vpack.c.bf16 %v629, %v627
  %v637 = vpack.c.bf16 %v634, %v632
  %v639 = vsel %vm112, %v615, 0
  %v642 = vsel %vm112, %v616, 0
  %644 = vmatpush.bf16.msra.mxu0 0
  %645 = vmatpush.bf16.msra.mxu0 0
  %646 = vmatpush.bf16.msra.mxu0 0
  %647 = vmatpush.bf16.msra.mxu0 0
  %648 = vmatpush.bf16.msra.mxu0 0
  %649 = vmatpush.bf16.msra.mxu0 0
  %650 = vmatpush.bf16.msra.mxu0 %v637
  %651 = vmatpush.bf16.msra.mxu0 %v636
  %652 = vmatmul.bf16.gmra.mxu0 %v639
  %v653 = vpop.f32.mrf.mxu0
  %v654 = vadd.f32 0.0, %v653
  %v655 = vpop.f32.mrf.mxu0
  %v656 = vadd.f32 0.0, %v655
  %657 = vmatmul.bf16.gmra.mxu0 %v642
  %v658 = vpop.f32.mrf.mxu0
  %v659 = vadd.f32 0.0, %v658
  %v660 = vpop.f32.mrf.mxu0
  %v661 = vadd.f32 0.0, %v660
  %662 = vdwg.mxu0
  %v663 = vmul.f32 %v611, 2.0
  %v664 = vmul.f32 %v612, 2.0
  %v665 = vmul.f32 %v613, 2.0
  %v666 = vmul.f32 %v614, 2.0
  %v667 = vsub.f32 %v663, %v654
  %v668 = vsub.f32 %v664, %v656
  %v669 = vsub.f32 %v665, %v659
  %v670 = vsub.f32 %v666, %v661
  %v671 = vpack.c.bf16 %v668, %v667
  %v672 = vpack.c.bf16 %v670, %v669
  %673 = vmatpush.bf16.msra.mxu0 0
  %674 = vmatpush.bf16.msra.mxu0 0
  %675 = vmatpush.bf16.msra.mxu0 0
  %676 = vmatpush.bf16.msra.mxu0 0
  %677 = vmatpush.bf16.msra.mxu0 0
  %678 = vmatpush.bf16.msra.mxu0 0
  %679 = vmatpush.bf16.msra.mxu0 %v672
  %680 = vmatpush.bf16.msra.mxu0 %v671
  %681 = vmatmul.bf16.gmra.mxu0 %v444
  %v682 = vpop.f32.mrf.mxu0
  %v683 = vadd.f32 0.0, %v682
  %v684 = vpop.f32.mrf.mxu0
  %v685 = vadd.f32 0.0, %v684
  %686 = vmatmul.bf16.gmra.mxu0 %v447
  %v687 = vpop.f32.mrf.mxu0
  %v688 = vadd.f32 0.0, %v687
  %v689 = vpop.f32.mrf.mxu0
  %v690 = vadd.f32 0.0, %v689
  %691 = vdwg.mxu0
  %v692 = vpack.c.bf16 %v685, %v683
  %v693 = vpack.c.bf16 %v690, %v688
  %v695 = vsel %vm112, %v671, 0
  %v698 = vsel %vm112, %v672, 0
  %700 = vmatpush.bf16.msra.mxu0 0
  %701 = vmatpush.bf16.msra.mxu0 0
  %702 = vmatpush.bf16.msra.mxu0 0
  %703 = vmatpush.bf16.msra.mxu0 0
  %704 = vmatpush.bf16.msra.mxu0 0
  %705 = vmatpush.bf16.msra.mxu0 0
  %706 = vmatpush.bf16.msra.mxu0 %v693
  %707 = vmatpush.bf16.msra.mxu0 %v692
  %708 = vmatmul.bf16.gmra.mxu0 %v695
  %v709 = vpop.f32.mrf.mxu0
  %v710 = vadd.f32 0.0, %v709
  %v711 = vpop.f32.mrf.mxu0
  %v712 = vadd.f32 0.0, %v711
  %713 = vmatmul.bf16.gmra.mxu0 %v698
  %v714 = vpop.f32.mrf.mxu0
  %v715 = vadd.f32 0.0, %v714
  %v716 = vpop.f32.mrf.mxu0
  %v717 = vadd.f32 0.0, %v716
  %718 = vdwg.mxu0
  %v719 = vmul.f32 %v667, 2.0
  %v720 = vmul.f32 %v668, 2.0
  %v721 = vmul.f32 %v669, 2.0
  %v722 = vmul.f32 %v670, 2.0
  %v723 = vsub.f32 %v719, %v710
  %v724 = vsub.f32 %v720, %v712
  %v725 = vsub.f32 %v721, %v715
  %v726 = vsub.f32 %v722, %v717
  %v727 = vpack.c.bf16 %v724, %v723
  %v728 = vpack.c.bf16 %v726, %v725
  %729 = vmatpush.bf16.msra.mxu0 0
  %730 = vmatpush.bf16.msra.mxu0 0
  %731 = vmatpush.bf16.msra.mxu0 0
  %732 = vmatpush.bf16.msra.mxu0 0
  %733 = vmatpush.bf16.msra.mxu0 0
  %734 = vmatpush.bf16.msra.mxu0 0
  %735 = vmatpush.bf16.msra.mxu0 %v728
  %736 = vmatpush.bf16.msra.mxu0 %v727
  %737 = vmatmul.bf16.gmra.mxu0 %v444
  %v738 = vpop.f32.mrf.mxu0
  %v739 = vadd.f32 0.0, %v738
  %v740 = vpop.f32.mrf.mxu0
  %v741 = vadd.f32 0.0, %v740
  %742 = vmatmul.bf16.gmra.mxu0 %v447
  %v743 = vpop.f32.mrf.mxu0
  %v744 = vadd.f32 0.0, %v743
  %v745 = vpop.f32.mrf.mxu0
  %v746 = vadd.f32 0.0, %v745
  %747 = vdwg.mxu0
  %v748 = vpack.c.bf16 %v741, %v739
  %v749 = vpack.c.bf16 %v746, %v744
  %v751 = vsel %vm112, %v727, 0
  %v754 = vsel %vm112, %v728, 0
  %756 = vmatpush.bf16.msra.mxu0 0
  %757 = vmatpush.bf16.msra.mxu0 0
  %758 = vmatpush.bf16.msra.mxu0 0
  %759 = vmatpush.bf16.msra.mxu0 0
  %760 = vmatpush.bf16.msra.mxu0 0
  %761 = vmatpush.bf16.msra.mxu0 0
  %762 = vmatpush.bf16.msra.mxu0 %v749
  %763 = vmatpush.bf16.msra.mxu0 %v748
  %764 = vmatmul.bf16.gmra.mxu0 %v751
  %v765 = vpop.f32.mrf.mxu0
  %v766 = vadd.f32 0.0, %v765
  %v767 = vpop.f32.mrf.mxu0
  %v768 = vadd.f32 0.0, %v767
  %769 = vmatmul.bf16.gmra.mxu0 %v754
  %v770 = vpop.f32.mrf.mxu0
  %v771 = vadd.f32 0.0, %v770
  %v772 = vpop.f32.mrf.mxu0
  %v773 = vadd.f32 0.0, %v772
  %774 = vdwg.mxu0
  %v775 = vmul.f32 %v723, 2.0
  %v776 = vmul.f32 %v724, 2.0
  %v777 = vmul.f32 %v725, 2.0
  %v778 = vmul.f32 %v726, 2.0
  %v779 = vsub.f32 %v775, %v766
  %v780 = vsub.f32 %v776, %v768
  %v781 = vsub.f32 %v777, %v771
  %v782 = vsub.f32 %v778, %v773
  %v783 = vpack.c.bf16 %v780, %v779
  %v784 = vpack.c.bf16 %v782, %v781
  %785 = vmatpush.bf16.msra.mxu0 0
  %786 = vmatpush.bf16.msra.mxu0 0
  %787 = vmatpush.bf16.msra.mxu0 0
  %788 = vmatpush.bf16.msra.mxu0 0
  %789 = vmatpush.bf16.msra.mxu0 0
  %790 = vmatpush.bf16.msra.mxu0 0
  %791 = vmatpush.bf16.msra.mxu0 %v784
  %792 = vmatpush.bf16.msra.mxu0 %v783
  %793 = vmatmul.bf16.gmra.mxu0 %v444
  %v794 = vpop.f32.mrf.mxu0
  %v795 = vadd.f32 0.0, %v794
  %v796 = vpop.f32.mrf.mxu0
  %v797 = vadd.f32 0.0, %v796
  %798 = vmatmul.bf16.gmra.mxu0 %v447
  %v799 = vpop.f32.mrf.mxu0
  %v800 = vadd.f32 0.0, %v799
  %v801 = vpop.f32.mrf.mxu0
  %v802 = vadd.f32 0.0, %v801
  %803 = vdwg.mxu0
  %v804 = vpack.c.bf16 %v797, %v795
  %v805 = vpack.c.bf16 %v802, %v800
  %v807 = vsel %vm112, %v783, 0
  %v810 = vsel %vm112, %v784, 0
  %812 = vmatpush.bf16.msra.mxu0 0
  %813 = vmatpush.bf16.msra.mxu0 0
  %814 = vmatpush.bf16.msra.mxu0 0
  %815 = vmatpush.bf16.msra.mxu0 0
  %816 = vmatpush.bf16.msra.mxu0 0
  %817 = vmatpush.bf16.msra.mxu0 0
  %818 = vmatpush.bf16.msra.mxu0 %v805
  %819 = vmatpush.bf16.msra.mxu0 %v804
  %820 = vmatmul.bf16.gmra.mxu0 %v807
  %v821 = vpop.f32.mrf.mxu0
  %v822 = vadd.f32 0.0, %v821
  %v823 = vpop.f32.mrf.mxu0
  %v824 = vadd.f32 0.0, %v823
  %825 = vmatmul.bf16.gmra.mxu0 %v810
  %v826 = vpop.f32.mrf.mxu0
  %v827 = vadd.f32 0.0, %v826
  %v828 = vpop.f32.mrf.mxu0
  %v829 = vadd.f32 0.0, %v828
  %830 = vdwg.mxu0
  %v831 = vmul.f32 %v779, 2.0
  %v832 = vmul.f32 %v780, 2.0
  %v833 = vmul.f32 %v781, 2.0
  %v834 = vmul.f32 %v782, 2.0
  %v835 = vsub.f32 %v831, %v822
  %v836 = vsub.f32 %v832, %v824
  %v837 = vsub.f32 %v833, %v827
  %v838 = vsub.f32 %v834, %v829
  %v839 = vpack.c.bf16 %v836, %v835
  %v840 = vpack.c.bf16 %v838, %v837
  %841 = vmatpush.bf16.msra.mxu0 0
  %842 = vmatpush.bf16.msra.mxu0 0
  %843 = vmatpush.bf16.msra.mxu0 0
  %844 = vmatpush.bf16.msra.mxu0 0
  %845 = vmatpush.bf16.msra.mxu0 0
  %846 = vmatpush.bf16.msra.mxu0 0
  %847 = vmatpush.bf16.msra.mxu0 %v840
  %848 = vmatpush.bf16.msra.mxu0 %v839
  %849 = vmatmul.bf16.gmra.mxu0 %v444
  %v850 = vpop.f32.mrf.mxu0
  %v851 = vadd.f32 0.0, %v850
  %v852 = vpop.f32.mrf.mxu0
  %v853 = vadd.f32 0.0, %v852
  %854 = vmatmul.bf16.gmra.mxu0 %v447
  %v855 = vpop.f32.mrf.mxu0
  %v856 = vadd.f32 0.0, %v855
  %v857 = vpop.f32.mrf.mxu0
  %v858 = vadd.f32 0.0, %v857
  %859 = vdwg.mxu0
  %v860 = vpack.c.bf16 %v853, %v851
  %v861 = vpack.c.bf16 %v858, %v856
  %v863 = vsel %vm112, %v839, 0
  %v866 = vsel %vm112, %v840, 0
  %868 = vmatpush.bf16.msra.mxu0 0
  %869 = vmatpush.bf16.msra.mxu0 0
  %870 = vmatpush.bf16.msra.mxu0 0
  %871 = vmatpush.bf16.msra.mxu0 0
  %872 = vmatpush.bf16.msra.mxu0 0
  %873 = vmatpush.bf16.msra.mxu0 0
  %874 = vmatpush.bf16.msra.mxu0 %v861
  %875 = vmatpush.bf16.msra.mxu0 %v860
  %876 = vmatmul.bf16.gmra.mxu0 %v863
  %v877 = vpop.f32.mrf.mxu0
  %v878 = vadd.f32 0.0, %v877
  %v879 = vpop.f32.mrf.mxu0
  %v880 = vadd.f32 0.0, %v879
  %881 = vmatmul.bf16.gmra.mxu0 %v866
  %v882 = vpop.f32.mrf.mxu0
  %v883 = vadd.f32 0.0, %v882
  %v884 = vpop.f32.mrf.mxu0
  %v885 = vadd.f32 0.0, %v884
  %886 = vdwg.mxu0
  %v887 = vmul.f32 %v835, 2.0
  %v888 = vmul.f32 %v836, 2.0
  %v889 = vmul.f32 %v837, 2.0
  %v890 = vmul.f32 %v838, 2.0
  %v891 = vsub.f32 %v887, %v878
  %v892 = vsub.f32 %v888, %v880
  %v893 = vsub.f32 %v889, %v883
  %v894 = vsub.f32 %v890, %v885
  %v895 = vmul.f32 %v891, 2.0
  %v896 = vmul.f32 %v892, 2.0
  %v897 = vmul.f32 %v893, 2.0
  %v898 = vmul.f32 %v894, 2.0
  %v900 = vsel %vm112, %v379, 0
  %v903 = vsel %vm112, %v382, 0
  %v906 = vsel %vm112, %v385, 0
  %v909 = vsel %vm112, %v388, 0
  %911 = vmatpush.msra.mxu0 0.0
  %912 = vmatpush.msra.mxu0 0.0
  %913 = vmatpush.msra.mxu0 0.0
  %914 = vmatpush.msra.mxu0 0.0
  %915 = vmatpush.msra.mxu0 0.0
  %916 = vmatpush.msra.mxu0 0.0
  %917 = vmatpush.msra.mxu0 0.0
  %918 = vmatpush.msra.mxu0 0.0
  %919 = vmatpush.msra.mxu0 0.0
  %920 = vmatpush.msra.mxu0 0.0
  %921 = vmatpush.msra.mxu0 0.0
  %922 = vmatpush.msra.mxu0 0.0
  %923 = vmatpush.msra.mxu0 %v894
  %924 = vmatpush.msra.mxu0 %v893
  %925 = vmatpush.msra.mxu0 %v892
  %926 = vmatpush.msra.mxu0 %v891
  %927 = vmatmul.f32.gmra.mxu0 %v900
  %v928 = vpop.f32.mrf.mxu0
  %v929 = vadd.f32 0.0, %v928
  %930 = vmatmul.f32.gmra.mxu0 %v903
  %v931 = vpop.f32.mrf.mxu0
  %v932 = vadd.f32 0.0, %v931
  %933 = vmatmul.f32.gmra.mxu0 %v906
  %v934 = vpop.f32.mrf.mxu0
  %v935 = vadd.f32 0.0, %v934
  %936 = vmatmul.f32.gmra.mxu0 %v909
  %v937 = vpop.f32.mrf.mxu0
  %v938 = vadd.f32 0.0, %v937
  %939 = vdwg.mxu0
  %v941 = vsel %vm112, %v891, 0
  %v944 = vsel %vm112, %v892, 0
  %v947 = vsel %vm112, %v893, 0
  %v950 = vsel %vm112, %v894, 0
  %952 = vmatpush.msra.mxu0 0.0
  %953 = vmatpush.msra.mxu0 0.0
  %954 = vmatpush.msra.mxu0 0.0
  %955 = vmatpush.msra.mxu0 0.0
  %956 = vmatpush.msra.mxu0 0.0
  %957 = vmatpush.msra.mxu0 0.0
  %958 = vmatpush.msra.mxu0 0.0
  %959 = vmatpush.msra.mxu0 0.0
  %960 = vmatpush.msra.mxu0 0.0
  %961 = vmatpush.msra.mxu0 0.0
  %962 = vmatpush.msra.mxu0 0.0
  %963 = vmatpush.msra.mxu0 0.0
  %964 = vmatpush.msra.mxu0 %v938
  %965 = vmatpush.msra.mxu0 %v935
  %966 = vmatpush.msra.mxu0 %v932
  %967 = vmatpush.msra.mxu0 %v929
  %968 = vmatmul.f32.gmra.mxu0 %v941
  %v969 = vpop.f32.mrf.mxu0
  %v970 = vadd.f32 0.0, %v969
  %971 = vmatmul.f32.gmra.mxu0 %v944
  %v972 = vpop.f32.mrf.mxu0
  %v973 = vadd.f32 0.0, %v972
  %974 = vmatmul.f32.gmra.mxu0 %v947
  %v975 = vpop.f32.mrf.mxu0
  %v976 = vadd.f32 0.0, %v975
  %977 = vmatmul.f32.gmra.mxu0 %v950
  %v978 = vpop.f32.mrf.mxu0
  %v979 = vadd.f32 0.0, %v978
  %980 = vdwg.mxu0
  %v981 = vsub.f32 %v895, %v970
  %v982 = vsub.f32 %v896, %v973
  %v983 = vsub.f32 %v897, %v976
  %v984 = vsub.f32 %v898, %v979
  %v985 = vmul.f32 %v981, 2.0
  %v986 = vmul.f32 %v982, 2.0
  %v987 = vmul.f32 %v983, 2.0
  %v988 = vmul.f32 %v984, 2.0
  %989 = vmatpush.msra.mxu0 0.0
  %990 = vmatpush.msra.mxu0 0.0
  %991 = vmatpush.msra.mxu0 0.0
  %992 = vmatpush.msra.mxu0 0.0
  %993 = vmatpush.msra.mxu0 0.0
  %994 = vmatpush.msra.mxu0 0.0
  %995 = vmatpush.msra.mxu0 0.0
  %996 = vmatpush.msra.mxu0 0.0
  %997 = vmatpush.msra.mxu0 0.0
  %998 = vmatpush.msra.mxu0 0.0
  %999 = vmatpush.msra.mxu0 0.0
  %1000 = vmatpush.msra.mxu0 0.0
  %1001 = vmatpush.msra.mxu0 %v984
  %1002 = vmatpush.msra.mxu0 %v983
  %1003 = vmatpush.msra.mxu0 %v982
  %1004 = vmatpush.msra.mxu0 %v981
  %1005 = vmatmul.f32.gmra.mxu0 %v900
  %v1006 = vpop.f32.mrf.mxu0
  %v1007 = vadd.f32 0.0, %v1006
  %1008 = vmatmul.f32.gmra.mxu0 %v903
  %v1009 = vpop.f32.mrf.mxu0
  %v1010 = vadd.f32 0.0, %v1009
  %1011 = vmatmul.f32.gmra.mxu0 %v906
  %v1012 = vpop.f32.mrf.mxu0
  %v1013 = vadd.f32 0.0, %v1012
  %1014 = vmatmul.f32.gmra.mxu0 %v909
  %v1015 = vpop.f32.mrf.mxu0
  %v1016 = vadd.f32 0.0, %v1015
  %1017 = vdwg.mxu0
  %v1019 = vsel %vm112, %v981, 0
  %v1022 = vsel %vm112, %v982, 0
  %v1025 = vsel %vm112, %v983, 0
  %v1028 = vsel %vm112, %v984, 0
  %1030 = vmatpush.msra.mxu0 0.0
  %1031 = vmatpush.msra.mxu0 0.0
  %1032 = vmatpush.msra.mxu0 0.0
  %1033 = vmatpush.msra.mxu0 0.0
  %1034 = vmatpush.msra.mxu0 0.0
  %1035 = vmatpush.msra.mxu0 0.0
  %1036 = vmatpush.msra.mxu0 0.0
  %1037 = vmatpush.msra.mxu0 0.0
  %1038 = vmatpush.msra.mxu0 0.0
  %1039 = vmatpush.msra.mxu0 0.0
  %1040 = vmatpush.msra.mxu0 0.0
  %1041 = vmatpush.msra.mxu0 0.0
  %1042 = vmatpush.msra.mxu0 %v1016
  %1043 = vmatpush.msra.mxu0 %v1013
  %1044 = vmatpush.msra.mxu0 %v1010
  %1045 = vmatpush.msra.mxu0 %v1007
  %1046 = vmatmul.f32.gmra.mxu0 %v1019
  %v1047 = vpop.f32.mrf.mxu0
  %v1048 = vadd.f32 0.0, %v1047
  %1049 = vmatmul.f32.gmra.mxu0 %v1022
  %v1050 = vpop.f32.mrf.mxu0
  %v1051 = vadd.f32 0.0, %v1050
  %1052 = vmatmul.f32.gmra.mxu0 %v1025
  %v1053 = vpop.f32.mrf.mxu0
  %v1054 = vadd.f32 0.0, %v1053
  %1055 = vmatmul.f32.gmra.mxu0 %v1028
  %v1056 = vpop.f32.mrf.mxu0
  %v1057 = vadd.f32 0.0, %v1056
  %1058 = vdwg.mxu0
  %v1059 = vsub.f32 %v985, %v1048
  %v1060 = vsub.f32 %v986, %v1051
  %v1061 = vsub.f32 %v987, %v1054
  %v1062 = vsub.f32 %v988, %v1057
  %v1064 = vsel %vm46, %v285, 0
  %v1067 = vsel %vm46, %v288, 0
  %v1070 = vsel %vm46, %v291, 0
  %v1073 = vsel %vm46, %v294, 0
  %v1076 = vsel %vm46, %v297, 0
  %v1079 = vsel %vm46, %v300, 0
  %v1082 = vsel %vm46, %v303, 0
  %v1085 = vsel %vm46, %v306, 0
  %1087 = vmatpush.xpose.msra.mxu0 0.0
  %1088 = vmatpush.xpose.msra.mxu0 0.0
  %1089 = vmatpush.xpose.msra.mxu0 0.0
  %1090 = vmatpush.xpose.msra.mxu0 0.0
  %1091 = vmatpush.xpose.msra.mxu0 0.0
  %1092 = vmatpush.xpose.msra.mxu0 0.0
  %1093 = vmatpush.xpose.msra.mxu0 0.0
  %1094 = vmatpush.xpose.msra.mxu0 0.0
  %1095 = vmatpush.xpose.msra.mxu0 0.0
  %1096 = vmatpush.xpose.msra.mxu0 0.0
  %1097 = vmatpush.xpose.msra.mxu0 0.0
  %1098 = vmatpush.xpose.msra.mxu0 0.0
  %1099 = vmatpush.xpose.msra.mxu0 %v318
  %1100 = vmatpush.xpose.msra.mxu0 %v315
  %1101 = vmatpush.xpose.msra.mxu0 %v312
  %1102 = vmatpush.xpose.msra.mxu0 %v309
  %1103 = vmatmul.f32.gmra.mxu0 %v1064
  %v1104 = vpop.f32.mrf.mxu0
  %v1105 = vadd.f32 0.0, %v1104
  %1106 = vmatmul.f32.gmra.mxu0 %v1067
  %v1107 = vpop.f32.mrf.mxu0
  %v1108 = vadd.f32 0.0, %v1107
  %1109 = vmatmul.f32.gmra.mxu0 %v1070
  %v1110 = vpop.f32.mrf.mxu0
  %v1111 = vadd.f32 0.0, %v1110
  %1112 = vmatmul.f32.gmra.mxu0 %v1073
  %v1113 = vpop.f32.mrf.mxu0
  %v1114 = vadd.f32 0.0, %v1113
  %1115 = vmatmul.f32.gmra.mxu0 %v1076
  %v1116 = vpop.f32.mrf.mxu0
  %v1117 = vadd.f32 0.0, %v1116
  %1118 = vmatmul.f32.gmra.mxu0 %v1079
  %v1119 = vpop.f32.mrf.mxu0
  %v1120 = vadd.f32 0.0, %v1119
  %1121 = vmatmul.f32.gmra.mxu0 %v1082
  %v1122 = vpop.f32.mrf.mxu0
  %v1123 = vadd.f32 0.0, %v1122
  %1124 = vmatmul.f32.gmra.mxu0 %v1085
  %v1125 = vpop.f32.mrf.mxu0
  %v1126 = vadd.f32 0.0, %v1125
  %1127 = vdwg.mxu0
  %v1129 = vsel %vm112, %v1105, 0
  %v1132 = vsel %vm112, %v1108, 0
  %v1135 = vsel %vm112, %v1111, 0
  %v1138 = vsel %vm112, %v1114, 0
  %v1141 = vsel %vm112, %v1117, 0
  %v1144 = vsel %vm112, %v1120, 0
  %v1147 = vsel %vm112, %v1123, 0
  %v1150 = vsel %vm112, %v1126, 0
  %1152 = vmatpush.msra.mxu0 0.0
  %1153 = vmatpush.msra.mxu0 0.0
  %1154 = vmatpush.msra.mxu0 0.0
  %1155 = vmatpush.msra.mxu0 0.0
  %1156 = vmatpush.msra.mxu0 0.0
  %1157 = vmatpush.msra.mxu0 0.0
  %1158 = vmatpush.msra.mxu0 0.0
  %1159 = vmatpush.msra.mxu0 0.0
  %1160 = vmatpush.msra.mxu0 0.0
  %1161 = vmatpush.msra.mxu0 0.0
  %1162 = vmatpush.msra.mxu0 0.0
  %1163 = vmatpush.msra.mxu0 0.0
  %1164 = vmatpush.msra.mxu0 %v1062
  %1165 = vmatpush.msra.mxu0 %v1061
  %1166 = vmatpush.msra.mxu0 %v1060
  %1167 = vmatpush.msra.mxu0 %v1059
  %1168 = vmatmul.f32.gmra.mxu0 %v1129
  %v1169 = vpop.f32.mrf.mxu0
  %v1170 = vadd.f32 0.0, %v1169
  %1171 = vmatmul.f32.gmra.mxu0 %v1132
  %v1172 = vpop.f32.mrf.mxu0
  %v1173 = vadd.f32 0.0, %v1172
  %1174 = vmatmul.f32.gmra.mxu0 %v1135
  %v1175 = vpop.f32.mrf.mxu0
  %v1176 = vadd.f32 0.0, %v1175
  %1177 = vmatmul.f32.gmra.mxu0 %v1138
  %v1178 = vpop.f32.mrf.mxu0
  %v1179 = vadd.f32 0.0, %v1178
  %1180 = vmatmul.f32.gmra.mxu0 %v1141
  %v1181 = vpop.f32.mrf.mxu0
  %v1182 = vadd.f32 0.0, %v1181
  %1183 = vmatmul.f32.gmra.mxu0 %v1144
  %v1184 = vpop.f32.mrf.mxu0
  %v1185 = vadd.f32 0.0, %v1184
  %1186 = vmatmul.f32.gmra.mxu0 %v1147
  %v1187 = vpop.f32.mrf.mxu0
  %v1188 = vadd.f32 0.0, %v1187
  %1189 = vmatmul.f32.gmra.mxu0 %v1150
  %v1190 = vpop.f32.mrf.mxu0
  %v1191 = vadd.f32 0.0, %v1190
  %1192 = vdwg.mxu0
  %v1193 = vperm.slane %v45, 0
  %v1194 = vmul.f32 %v1170, %v1193
  %v1195 = vmul.f32 %v1173, %v1193
  %v1196 = vmul.f32 %v1176, %v1193
  %v1197 = vmul.f32 %v1179, %v1193
  %v1198 = vmul.f32 %v1182, %v1193
  %v1199 = vmul.f32 %v1185, %v1193
  %v1200 = vmul.f32 %v1188, %v1193
  %v1201 = vmul.f32 %v1191, %v1193
  %v1202 = vsel %vm112, %v1194, 0.0
  %1203 = vadd.xlane.f32.xlu0 %v1202
  %v1204 = vpop.xlane.xlu0 %1203
  %v1205 = vsel %vm112, %v1195, 0.0
  %1206 = vadd.xlane.f32.xlu0 %v1205
  %v1207 = vpop.xlane.xlu0 %1206
  %v1208 = vsel %vm112, %v1196, 0.0
  %1209 = vadd.xlane.f32.xlu0 %v1208
  %v1210 = vpop.xlane.xlu0 %1209
  %v1211 = vsel %vm112, %v1197, 0.0
  %1212 = vadd.xlane.f32.xlu0 %v1211
  %v1213 = vpop.xlane.xlu0 %1212
  %v1214 = vsel %vm112, %v1198, 0.0
  %1215 = vadd.xlane.f32.xlu0 %v1214
  %v1216 = vpop.xlane.xlu0 %1215
  %v1217 = vsel %vm112, %v1199, 0.0
  %1218 = vadd.xlane.f32.xlu0 %v1217
  %v1219 = vpop.xlane.xlu0 %1218
  %v1220 = vsel %vm112, %v1200, 0.0
  %1221 = vadd.xlane.f32.xlu0 %v1220
  %v1222 = vpop.xlane.xlu0 %1221
  %v1223 = vsel %vm112, %v1201, 0.0
  %1224 = vadd.xlane.f32.xlu0 %v1223
  %v1225 = vpop.xlane.xlu0 %1224
  %v1226 = vadd.f32 %v9, %v1204
  %v1227 = vadd.f32 %v10, %v1207
  %v1228 = vadd.f32 %v11, %v1210
  %v1229 = vadd.f32 %v12, %v1213
  %v1230 = vadd.f32 %v13, %v1216
  %v1231 = vadd.f32 %v14, %v1219
  %v1232 = vadd.f32 %v15, %v1222
  %v1233 = vadd.f32 %v16, %v1225
  %v1234 = vadd.s32 %v417, 32
  %v1235 = vadd.s32 %v417, 40
  %v1236 = vadd.s32 %v417, 48
  %v1237 = vadd.s32 %v417, 56
  %vm1238 = vcmp.eq.s32.totalorder %v1234, %v422
  %vm1239 = vcmp.eq.s32.totalorder %v1235, %v422
  %vm1240 = vcmp.eq.s32.totalorder %v1236, %v422
  %vm1241 = vcmp.eq.s32.totalorder %v1237, %v422
  %v1242 = vsel %vm1238, 1, 0
  %v1243 = vsel %vm1239, 1, 0
  %v1244 = vsel %vm1240, 1, 0
  %v1245 = vsel %vm1241, 1, 0
  %v1246 = vcvt.s32.f32 %v1242
  %v1247 = vcvt.s32.f32 %v1243
  %v1248 = vcvt.s32.f32 %v1244
  %v1249 = vcvt.s32.f32 %v1245
  %v1251 = vsel %vm112, %v1170, 0
  %v1254 = vsel %vm112, %v1173, 0
  %v1257 = vsel %vm112, %v1176, 0
  %v1260 = vsel %vm112, %v1179, 0
  %v1263 = vsel %vm112, %v1182, 0
  %v1266 = vsel %vm112, %v1185, 0
  %v1269 = vsel %vm112, %v1188, 0
  %v1272 = vsel %vm112, %v1191, 0
  %1274 = vmatpush.msra.mxu0 0.0
  %1275 = vmatpush.msra.mxu0 0.0
  %1276 = vmatpush.msra.mxu0 0.0
  %1277 = vmatpush.msra.mxu0 0.0
  %1278 = vmatpush.msra.mxu0 0.0
  %1279 = vmatpush.msra.mxu0 0.0
  %1280 = vmatpush.msra.mxu0 0.0
  %1281 = vmatpush.msra.mxu0 0.0
  %1282 = vmatpush.msra.mxu0 0.0
  %1283 = vmatpush.msra.mxu0 0.0
  %1284 = vmatpush.msra.mxu0 0.0
  %1285 = vmatpush.msra.mxu0 0.0
  %1286 = vmatpush.msra.mxu0 %v36
  %1287 = vmatpush.msra.mxu0 %v35
  %1288 = vmatpush.msra.mxu0 %v34
  %1289 = vmatpush.msra.mxu0 %v33
  %1290 = vmatmul.f32.gmra.mxu0 %v1251
  %v1291 = vpop.f32.mrf.mxu0
  %v1292 = vadd.f32 0.0, %v1291
  %1293 = vmatmul.f32.gmra.mxu0 %v1254
  %v1294 = vpop.f32.mrf.mxu0
  %v1295 = vadd.f32 0.0, %v1294
  %1296 = vmatmul.f32.gmra.mxu0 %v1257
  %v1297 = vpop.f32.mrf.mxu0
  %v1298 = vadd.f32 0.0, %v1297
  %1299 = vmatmul.f32.gmra.mxu0 %v1260
  %v1300 = vpop.f32.mrf.mxu0
  %v1301 = vadd.f32 0.0, %v1300
  %1302 = vmatmul.f32.gmra.mxu0 %v1263
  %v1303 = vpop.f32.mrf.mxu0
  %v1304 = vadd.f32 0.0, %v1303
  %1305 = vmatmul.f32.gmra.mxu0 %v1266
  %v1306 = vpop.f32.mrf.mxu0
  %v1307 = vadd.f32 0.0, %v1306
  %1308 = vmatmul.f32.gmra.mxu0 %v1269
  %v1309 = vpop.f32.mrf.mxu0
  %v1310 = vadd.f32 0.0, %v1309
  %1311 = vmatmul.f32.gmra.mxu0 %v1272
  %v1312 = vpop.f32.mrf.mxu0
  %v1313 = vadd.f32 0.0, %v1312
  %1314 = vdwg.mxu0
  %v1315 = vsub.f32 %v431, %v1292
  %v1316 = vsub.f32 %v432, %v1295
  %v1317 = vsub.f32 %v433, %v1298
  %v1318 = vsub.f32 %v434, %v1301
  %v1319 = vsub.f32 %v1246, %v1304
  %v1320 = vsub.f32 %v1247, %v1307
  %v1321 = vsub.f32 %v1248, %v1310
  %v1322 = vsub.f32 %v1249, %v1313
  %v1324 = vsel %vm46, %v1315, 0
  %v1327 = vsel %vm46, %v1316, 0
  %v1330 = vsel %vm46, %v1317, 0
  %v1333 = vsel %vm46, %v1318, 0
  %v1336 = vsel %vm46, %v1319, 0
  %v1339 = vsel %vm46, %v1320, 0
  %v1342 = vsel %vm46, %v1321, 0
  %v1345 = vsel %vm46, %v1322, 0
  %1347 = vmatpush.msra.mxu0 0.0
  %1348 = vmatpush.msra.mxu0 0.0
  %1349 = vmatpush.msra.mxu0 0.0
  %1350 = vmatpush.msra.mxu0 0.0
  %1351 = vmatpush.msra.mxu0 0.0
  %1352 = vmatpush.msra.mxu0 0.0
  %1353 = vmatpush.msra.mxu0 0.0
  %1354 = vmatpush.msra.mxu0 0.0
  %1355 = vmatpush.msra.mxu0 %v306
  %1356 = vmatpush.msra.mxu0 %v303
  %1357 = vmatpush.msra.mxu0 %v300
  %1358 = vmatpush.msra.mxu0 %v297
  %1359 = vmatpush.msra.mxu0 %v294
  %1360 = vmatpush.msra.mxu0 %v291
  %1361 = vmatpush.msra.mxu0 %v288
  %1362 = vmatpush.msra.mxu0 %v285
  %1363 = vmatmul.f32.gmra.mxu0 %v1324
  %v1364 = vpop.f32.mrf.mxu0
  %v1365 = vadd.f32 0.0, %v1364
  %1366 = vmatmul.f32.gmra.mxu0 %v1327
  %v1367 = vpop.f32.mrf.mxu0
  %v1368 = vadd.f32 0.0, %v1367
  %1369 = vmatmul.f32.gmra.mxu0 %v1330
  %v1370 = vpop.f32.mrf.mxu0
  %v1371 = vadd.f32 0.0, %v1370
  %1372 = vmatmul.f32.gmra.mxu0 %v1333
  %v1373 = vpop.f32.mrf.mxu0
  %v1374 = vadd.f32 0.0, %v1373
  %1375 = vmatmul.f32.gmra.mxu0 %v1336
  %v1376 = vpop.f32.mrf.mxu0
  %v1377 = vadd.f32 0.0, %v1376
  %1378 = vmatmul.f32.gmra.mxu0 %v1339
  %v1379 = vpop.f32.mrf.mxu0
  %v1380 = vadd.f32 0.0, %v1379
  %1381 = vmatmul.f32.gmra.mxu0 %v1342
  %v1382 = vpop.f32.mrf.mxu0
  %v1383 = vadd.f32 0.0, %v1382
  %1384 = vmatmul.f32.gmra.mxu0 %v1345
  %v1385 = vpop.f32.mrf.mxu0
  %v1386 = vadd.f32 0.0, %v1385
  %1387 = vdwg.mxu0
  %1388 = vmatpush.msra.mxu0 0.0
  %1389 = vmatpush.msra.mxu0 0.0
  %1390 = vmatpush.msra.mxu0 0.0
  %1391 = vmatpush.msra.mxu0 0.0
  %1392 = vmatpush.msra.mxu0 0.0
  %1393 = vmatpush.msra.mxu0 0.0
  %1394 = vmatpush.msra.mxu0 0.0
  %1395 = vmatpush.msra.mxu0 0.0
  %1396 = vmatpush.msra.mxu0 0.0
  %1397 = vmatpush.msra.mxu0 0.0
  %1398 = vmatpush.msra.mxu0 0.0
  %1399 = vmatpush.msra.mxu0 0.0
  %1400 = vmatpush.msra.mxu0 %v44
  %1401 = vmatpush.msra.mxu0 %v43
  %1402 = vmatpush.msra.mxu0 %v42
  %1403 = vmatpush.msra.mxu0 %v41
  %1404 = vmatmul.f32.gmra.mxu0 %v1251
  %v1405 = vpop.f32.mrf.mxu0
  %v1406 = vadd.f32 0.0, %v1405
  %1407 = vmatmul.f32.gmra.mxu0 %v1254
  %v1408 = vpop.f32.mrf.mxu0
  %v1409 = vadd.f32 0.0, %v1408
  %1410 = vmatmul.f32.gmra.mxu0 %v1257
  %v1411 = vpop.f32.mrf.mxu0
  %v1412 = vadd.f32 0.0, %v1411
  %1413 = vmatmul.f32.gmra.mxu0 %v1260
  %v1414 = vpop.f32.mrf.mxu0
  %v1415 = vadd.f32 0.0, %v1414
  %1416 = vmatmul.f32.gmra.mxu0 %v1263
  %v1417 = vpop.f32.mrf.mxu0
  %v1418 = vadd.f32 0.0, %v1417
  %1419 = vmatmul.f32.gmra.mxu0 %v1266
  %v1420 = vpop.f32.mrf.mxu0
  %v1421 = vadd.f32 0.0, %v1420
  %1422 = vmatmul.f32.gmra.mxu0 %v1269
  %v1423 = vpop.f32.mrf.mxu0
  %v1424 = vadd.f32 0.0, %v1423
  %1425 = vmatmul.f32.gmra.mxu0 %v1272
  %v1426 = vpop.f32.mrf.mxu0
  %v1427 = vadd.f32 0.0, %v1426
  %1428 = vdwg.mxu0
  %v1430 = vsel %vm112, %v1406, 0
  %v1433 = vsel %vm112, %v1409, 0
  %v1436 = vsel %vm112, %v1412, 0
  %v1439 = vsel %vm112, %v1415, 0
  %v1442 = vsel %vm112, %v1418, 0
  %v1445 = vsel %vm112, %v1421, 0
  %v1448 = vsel %vm112, %v1424, 0
  %v1451 = vsel %vm112, %v1427, 0
  %1453 = vmatpush.xpose.msra.mxu0 0.0
  %1454 = vmatpush.xpose.msra.mxu0 0.0
  %1455 = vmatpush.xpose.msra.mxu0 0.0
  %1456 = vmatpush.xpose.msra.mxu0 0.0
  %1457 = vmatpush.xpose.msra.mxu0 0.0
  %1458 = vmatpush.xpose.msra.mxu0 0.0
  %1459 = vmatpush.xpose.msra.mxu0 0.0
  %1460 = vmatpush.xpose.msra.mxu0 0.0
  %1461 = vmatpush.xpose.msra.mxu0 %v1272
  %1462 = vmatpush.xpose.msra.mxu0 %v1269
  %1463 = vmatpush.xpose.msra.mxu0 %v1266
  %1464 = vmatpush.xpose.msra.mxu0 %v1263
  %1465 = vmatpush.xpose.msra.mxu0 %v1260
  %1466 = vmatpush.xpose.msra.mxu0 %v1257
  %1467 = vmatpush.xpose.msra.mxu0 %v1254
  %1468 = vmatpush.xpose.msra.mxu0 %v1251
  %1469 = vmatmul.f32.gmra.mxu0 %v1430
  %v1470 = vpop.f32.mrf.mxu0
  %v1471 = vadd.f32 0.0, %v1470
  %1472 = vmatmul.f32.gmra.mxu0 %v1433
  %v1473 = vpop.f32.mrf.mxu0
  %v1474 = vadd.f32 0.0, %v1473
  %1475 = vmatmul.f32.gmra.mxu0 %v1436
  %v1476 = vpop.f32.mrf.mxu0
  %v1477 = vadd.f32 0.0, %v1476
  %1478 = vmatmul.f32.gmra.mxu0 %v1439
  %v1479 = vpop.f32.mrf.mxu0
  %v1480 = vadd.f32 0.0, %v1479
  %1481 = vmatmul.f32.gmra.mxu0 %v1442
  %v1482 = vpop.f32.mrf.mxu0
  %v1483 = vadd.f32 0.0, %v1482
  %1484 = vmatmul.f32.gmra.mxu0 %v1445
  %v1485 = vpop.f32.mrf.mxu0
  %v1486 = vadd.f32 0.0, %v1485
  %1487 = vmatmul.f32.gmra.mxu0 %v1448
  %v1488 = vpop.f32.mrf.mxu0
  %v1489 = vadd.f32 0.0, %v1488
  %1490 = vmatmul.f32.gmra.mxu0 %v1451
  %v1491 = vpop.f32.mrf.mxu0
  %v1492 = vadd.f32 0.0, %v1491
  %1493 = vdwg.mxu0
  %v1495 = vsel %vm46, %v1365, 0
  %v1498 = vsel %vm46, %v1368, 0
  %v1501 = vsel %vm46, %v1371, 0
  %v1504 = vsel %vm46, %v1374, 0
  %v1507 = vsel %vm46, %v1377, 0
  %v1510 = vsel %vm46, %v1380, 0
  %v1513 = vsel %vm46, %v1383, 0
  %v1516 = vsel %vm46, %v1386, 0
  %1518 = vmatpush.xpose.msra.mxu0 0.0
  %1519 = vmatpush.xpose.msra.mxu0 0.0
  %1520 = vmatpush.xpose.msra.mxu0 0.0
  %1521 = vmatpush.xpose.msra.mxu0 0.0
  %1522 = vmatpush.xpose.msra.mxu0 0.0
  %1523 = vmatpush.xpose.msra.mxu0 0.0
  %1524 = vmatpush.xpose.msra.mxu0 0.0
  %1525 = vmatpush.xpose.msra.mxu0 0.0
  %1526 = vmatpush.xpose.msra.mxu0 %v1345
  %1527 = vmatpush.xpose.msra.mxu0 %v1342
  %1528 = vmatpush.xpose.msra.mxu0 %v1339
  %1529 = vmatpush.xpose.msra.mxu0 %v1336
  %1530 = vmatpush.xpose.msra.mxu0 %v1333
  %1531 = vmatpush.xpose.msra.mxu0 %v1330
  %1532 = vmatpush.xpose.msra.mxu0 %v1327
  %1533 = vmatpush.xpose.msra.mxu0 %v1324
  %1534 = vmatmul.f32.gmra.mxu0 %v1495
  %v1535 = vpop.f32.mrf.mxu0
  %v1536 = vadd.f32 %v1471, %v1535
  %1537 = vmatmul.f32.gmra.mxu0 %v1498
  %v1538 = vpop.f32.mrf.mxu0
  %v1539 = vadd.f32 %v1474, %v1538
  %1540 = vmatmul.f32.gmra.mxu0 %v1501
  %v1541 = vpop.f32.mrf.mxu0
  %v1542 = vadd.f32 %v1477, %v1541
  %1543 = vmatmul.f32.gmra.mxu0 %v1504
  %v1544 = vpop.f32.mrf.mxu0
  %v1545 = vadd.f32 %v1480, %v1544
  %1546 = vmatmul.f32.gmra.mxu0 %v1507
  %v1547 = vpop.f32.mrf.mxu0
  %v1548 = vadd.f32 %v1483, %v1547
  %1549 = vmatmul.f32.gmra.mxu0 %v1510
  %v1550 = vpop.f32.mrf.mxu0
  %v1551 = vadd.f32 %v1486, %v1550
  %1552 = vmatmul.f32.gmra.mxu0 %v1513
  %v1553 = vpop.f32.mrf.mxu0
  %v1554 = vadd.f32 %v1489, %v1553
  %1555 = vmatmul.f32.gmra.mxu0 %v1516
  %v1556 = vpop.f32.mrf.mxu0
  %v1557 = vadd.f32 %v1492, %v1556
  %1558 = vdwg.mxu0
  %1560 = vset.pattern.permute.xlu0 64
  %1561 = vperm.xlu0 %1560, %v1226
  %v1562 = vpop.permute.xlu0 %1561
  %1565 = vset.pattern.permute.xlu0 64
  %1566 = vperm.xlu0 %1565, %v1227
  %v1567 = vpop.permute.xlu0 %1566
  %1570 = vset.pattern.permute.xlu0 64
  %1571 = vperm.xlu0 %1570, %v1228
  %v1572 = vpop.permute.xlu0 %1571
  %1575 = vset.pattern.permute.xlu0 64
  %1576 = vperm.xlu0 %1575, %v1229
  %v1577 = vpop.permute.xlu0 %1576
  %1580 = vset.pattern.permute.xlu0 64
  %1581 = vperm.xlu0 %1580, %v1230
  %v1582 = vpop.permute.xlu0 %1581
  %1585 = vset.pattern.permute.xlu0 64
  %1586 = vperm.xlu0 %1585, %v1231
  %v1587 = vpop.permute.xlu0 %1586
  %1590 = vset.pattern.permute.xlu0 64
  %1591 = vperm.xlu0 %1590, %v1232
  %v1592 = vpop.permute.xlu0 %1591
  %1595 = vset.pattern.permute.xlu0 64
  %1596 = vperm.xlu0 %1595, %v1233
  %v1597 = vpop.permute.xlu0 %1596
  %v1599 = vsel %vm46, %v1536, %v1562
  %v1600 = vsel %vm46, %v1539, %v1567
  %v1601 = vsel %vm46, %v1542, %v1572
  %v1602 = vsel %vm46, %v1545, %v1577
  %v1603 = vsel %vm46, %v1548, %v1582
  %v1604 = vsel %vm46, %v1551, %v1587
  %v1605 = vsel %vm46, %v1554, %v1592
  %v1606 = vsel %vm46, %v1557, %v1597
  %1607 = vst [vmem:[%s1] sm:$0xff] %v1599
  %1608 = vst [vmem:[%s1 + $0x8] sm:$0xff] %v1600
  %1609 = vst [vmem:[%s1 + $0x10] sm:$0xff] %v1601
  %1610 = vst [vmem:[%s1 + $0x18] sm:$0xff] %v1602
  %1611 = vst [vmem:[%s1 + $0x20] sm:$0xff] %v1603
  %1612 = vst [vmem:[%s1 + $0x28] sm:$0xff] %v1604
  %1613 = vst [vmem:[%s1 + $0x30] sm:$0xff] %v1605
  %1614 = vst [vmem:[%s1 + $0x38] sm:$0xff] %v1606
  // Predicated region
  $region6: #{ekf_update_pallas.1} parent=0 // pred_check
    _
  $region7: #{ekf_update_pallas.1} parent=0 // pred_check_branch
    %1616 = sbr.rel (0) target = $region9
  $region8: #{ekf_update_pallas.1} parent=0 // pred_region
    _
  $region9: #{ekf_update_pallas.1} parent=0 // pred_fallthru
    _
  // Predicated region
  $region10: #{ekf_update_pallas.1} parent=0 // pred_check
    _
  $region11: #{ekf_update_pallas.1} parent=0 // pred_check_branch
    %1618 = sbr.rel (0) target = $region13
  $region12: #{ekf_update_pallas.1} parent=0 // pred_region
    _
  $region13: #{ekf_update_pallas.1} parent=0 // pred_fallthru
    _

</llo_original>
